<compile_context>
chip_gen: v7x
topology: tpu7x:2x2x1
jax: 0.10.0
libtpu: 0.0.40
codegen_flags: <defaults>
</compile_context>

<pallas_src>
import functools

import jax
import jax.numpy as jnp
from jax import lax
from jax.experimental import pallas as pl
from jax.experimental.pallas import tpu as pltpu

_EPS = 1e-12   # F.normalize default eps
_LANES = 128


def _round_up(n, m):
    return ((n + m - 1) // m) * m


def fuse_encoder_params(w1, b1, w2, b2):
    """Precompute (once, at init) the fused, lane-padded weight and bias.

    w*: [D_out, D_in] (PyTorch layout), b*: [D_out].
    Returns w_fused [D_in, 2*Dp], b_fused [1, 2*Dp] with Dp = D_out rounded up
    to a 128-lane multiple when D_out >= 128.  Pad columns have zero weight
    and zero bias, so they contribute nothing to the per-head sum of squares.
    """
    D_out, D_in = w1.shape
    Dp = _round_up(D_out, _LANES) if D_out >= _LANES else D_out
    pad = Dp - D_out
    w1t, w2t = jnp.transpose(w1), jnp.transpose(w2)
    if pad:
        zw = jnp.zeros((D_in, pad), w1.dtype)
        w1t = jnp.concatenate([w1t, zw], axis=1)
        w2t = jnp.concatenate([w2t, zw], axis=1)
        b1 = jnp.concatenate([b1, jnp.zeros((pad,), b1.dtype)])
        b2 = jnp.concatenate([b2, jnp.zeros((pad,), b2.dtype)])
    w_fused = jnp.concatenate([w1t, w2t], axis=1)                       # [D_in, 2*Dp]
    b_fused = jnp.concatenate([b1, b2]).astype(jnp.float32).reshape(1, 2 * Dp)
    return w_fused, b_fused


def _encoder_kernel(x_ref, w_ref, b_ref, o1_ref, o2_ref, *, d_head):
    # One fused MXU matmul with f32 accumulation: [tile, D_in] @ [D_in, 2*Dp].
    y = jnp.dot(x_ref[...], w_ref[...], preferred_element_type=jnp.float32)
    y = y + b_ref[...]

    # Per-head L2 norms without slicing/concatenating at a non-lane boundary:
    # head 1 = columns [0, d_head), head 2 = columns [d_head, 2*d_head).
    col = lax.broadcasted_iota(jnp.int32, y.shape, 1)
    in_head1 = col < d_head
    sq = y * y
    sum_all = jnp.sum(sq, axis=1, keepdims=True)
    sum1 = jnp.sum(jnp.where(in_head1, sq, 0.0), axis=1, keepdims=True)
    sum2 = sum_all - sum1

    # 1 / max(||row||, eps) == rsqrt(max(sumsq, eps^2))  -> EUP slot.
    inv1 = lax.rsqrt(jnp.maximum(sum1, _EPS * _EPS))
    inv2 = lax.rsqrt(jnp.maximum(sum2, _EPS * _EPS))
    inv = jnp.where(in_head1, inv1, inv2)

    y_n = y * inv
    o1_ref[...] = y_n[:, :d_head].astype(o1_ref.dtype)
    o2_ref[...] = y_n[:, d_head:].astype(o2_ref.dtype)


def _build_call(N_pad, D_in, Dp, tile, out_dtype, weight_pipeline_mode, vmem_limit_bytes):
    W = 2 * Dp
    wb_kwargs = {}
    if weight_pipeline_mode is not None:
        wb_kwargs["pipeline_mode"] = weight_pipeline_mode
    cp_kwargs = {"dimension_semantics": ("parallel",)}
    if vmem_limit_bytes is not None:
        cp_kwargs["vmem_limit_bytes"] = int(vmem_limit_bytes)
    return pl.pallas_call(
        functools.partial(_encoder_kernel, d_head=Dp),
        out_shape=(
            jax.ShapeDtypeStruct((N_pad, Dp), out_dtype),
            jax.ShapeDtypeStruct((N_pad, Dp), out_dtype),
        ),
        grid_spec=pl.GridSpec(
            grid=(N_pad // tile,),
            in_specs=[
                pl.BlockSpec((tile, D_in), lambda i: (i, 0)),            # x row-tile
                pl.BlockSpec((D_in, W), lambda i: (0, 0), **wb_kwargs),  # fused W (resident)
                pl.BlockSpec((1, W), lambda i: (0, 0), **wb_kwargs),     # fused bias
            ],
            out_specs=(
                pl.BlockSpec((tile, Dp), lambda i: (i, 0)),
                pl.BlockSpec((tile, Dp), lambda i: (i, 0)),
            ),
        ),
        compiler_params=pltpu.CompilerParams(**cp_kwargs),
    )


def encoder_net_forward(x, w_fused, b_fused, d_out, *, row_tile=512, matmul_dtype=None):
    """x: [N, D_in]; (w_fused, b_fused) from fuse_encoder_params; d_out = dims[1]."""
    N, D_in = x.shape
    W = w_fused.shape[1]
    Dp = W // 2
    out_dtype = x.dtype

    # bf16 inputs halve HBM traffic / double MXU throughput on v6e/v7x while
    # keeping f32 accumulation and f32 normalization inside the kernel.
    if matmul_dtype is not None:
        x = x.astype(matmul_dtype)
        w_fused = w_fused.astype(matmul_dtype)
    sub = 16 if x.dtype == jnp.bfloat16 else 8   # sublane packing granularity

    # Row tile: big tiles amortize per-step overhead; when fewer than two full
    # tiles exist, split N into exactly two balanced grid steps so v7x's two
    # TensorCores get near-equal work (grid axis is "parallel").
    if N < 2 * row_tile:
        tile = max(sub, _round_up(pl.cdiv(N, 2), sub))
    else:
        tile = _round_up(row_tile, sub)
    N_pad = _round_up(N, tile)
    if N_pad != N:
        x = jnp.pad(x, ((0, N_pad - N), (0, 0)))

    # Rough VMEM footprint; raise the scoped limit only when the conservative
    # default (16 MiB on v5e) would be tight.
    itemsize = jnp.dtype(x.dtype).itemsize
    est = (2 * tile * D_in * itemsize          # double-buffered x tile
           + 2 * (D_in + 1) * W * itemsize     # weight + bias (<= 2 buffers)
           + 3 * tile * W * 4                  # f32 matmul result + temporaries
           + 2 * 2 * tile * Dp * 4)            # two double-buffered output tiles
    vmem_limit = None
    if est > 12 * 1024 * 1024:
        vmem_limit = min(2 * est, 96 * 1024 * 1024)

    try:
        # Grid-invariant weights/bias: single-buffer them to save VMEM
        # (matters on v7x's 64 MiB).  Fall back if this JAX version does not
        # support BlockSpec.pipeline_mode / pl.Buffered(1).
        call = _build_call(N_pad, D_in, Dp, tile, out_dtype, pl.Buffered(1), vmem_limit)
        out1, out2 = call(x, w_fused, b_fused)
    except Exception:
        call = _build_call(N_pad, D_in, Dp, tile, out_dtype, None, vmem_limit)
        out1, out2 = call(x, w_fused, b_fused)

    if N_pad != N:
        out1, out2 = out1[:N], out2[:N]
    if Dp != d_out:
        out1, out2 = out1[:, :d_out], out2[:, :d_out]
    return out1, out2


def _reference(x, w1, b1, w2, b2):
    y1 = x @ w1.T + b1
    y2 = x @ w2.T + b2
    n1 = jnp.maximum(jnp.linalg.norm(y1, axis=1, keepdims=True), _EPS)
    n2 = jnp.maximum(jnp.linalg.norm(y2, axis=1, keepdims=True), _EPS)
    return y1 / n1, y2 / n2


if __name__ == "__main__":
    # dims = [D_in, D_hidden]; N is a non-multiple of the tile so the padding
    # and balanced two-step grid paths are exercised.
    D_in, D_hid = 64, 32
    N = 300

    key = jax.random.PRNGKey(0)
    kx, k1, k2, k3, k4 = jax.random.split(key, 5)

    x = jax.random.normal(kx, (N, D_in), dtype=jnp.float32)
    # Deterministic init mimicking nn.Linear's uniform(-1/sqrt(fan_in), 1/sqrt(fan_in)).
    bound = 1.0 / (D_in ** 0.5)
    w1 = jax.random.uniform(k1, (D_hid, D_in), jnp.float32, -bound, bound)
    b1 = jax.random.uniform(k2, (D_hid,), jnp.float32, -bound, bound)
    w2 = jax.random.uniform(k3, (D_hid, D_in), jnp.float32, -bound, bound)
    b2 = jax.random.uniform(k4, (D_hid,), jnp.float32, -bound, bound)

    # Fused params computed once (init time), not per forward call.
    w_fused, b_fused = fuse_encoder_params(w1, b1, w2, b2)

    ref1, ref2 = _reference(x, w1, b1, w2, b2)

    # f32 path (tight check against the exact reference).
    out1, out2 = encoder_net_forward(x, w_fused, b_fused, D_hid)
    jax.block_until_ready((out1, out2))
    assert out1.shape == ref1.shape and out2.shape == ref2.shape
    assert jnp.allclose(out1, ref1, atol=2e-3, rtol=2e-3)
    assert jnp.allclose(out2, ref2, atol=2e-3, rtol=2e-3)

    # bf16 MXU path (recommended on v6e/v7x): f32 accumulate + normalize,
    # tolerance widened for the bf16 inputs.
    o1b, o2b = encoder_net_forward(x, w_fused, b_fused, D_hid, matmul_dtype=jnp.bfloat16)
    jax.block_until_ready((o1b, o2b))
    assert jnp.allclose(o1b, ref1, atol=5e-2, rtol=5e-2)
    assert jnp.allclose(o2b, ref2, atol=5e-2, rtol=5e-2)

    print("KERNEL_OK")
</pallas_src>

<mosaic_0001>
module attributes {stable_mosaic.version = 11 : i64} {
  func.func @_encoder_kernel(%arg0: i32, %arg1: memref<152x64xf32, #tpu.memory_space<vmem>>, %arg2: memref<64x64xf32, #tpu.memory_space<vmem>>, %arg3: memref<1x64xf32, #tpu.memory_space<vmem>>, %arg4: memref<152x32xf32, #tpu.memory_space<vmem>>, %arg5: memref<152x32xf32, #tpu.memory_space<vmem>>) attributes {dimension_semantics = [#tpu.dimension_semantics<parallel>], iteration_bounds = array<i64: 2>, scalar_prefetch = 0 : i64, scratch_operands = 0 : i64, tpu.core_type = #tpu.core_type<tc>, window_params = [{transform_indices = @transform_0, window_bounds = array<i64: 152, 64>}, {pipeline_mode = #tpu.pipeline_mode<synchronous>, transform_indices = @transform_1, window_bounds = array<i64: 64, 64>}, {pipeline_mode = #tpu.pipeline_mode<synchronous>, transform_indices = @transform_2, window_bounds = array<i64: 1, 64>}, {transform_indices = @transform_3, window_bounds = array<i64: 152, 32>}, {transform_indices = @transform_4, window_bounds = array<i64: 152, 32>}]} {
    %c0 = arith.constant 0 : index
    %c0_0 = arith.constant 0 : index
    %0 = vector.load %arg1[%c0, %c0_0] : memref<152x64xf32, #tpu.memory_space<vmem>>, vector<152x64xf32>
    %c0_1 = arith.constant 0 : index
    %c0_2 = arith.constant 0 : index
    %1 = vector.load %arg2[%c0_1, %c0_2] : memref<64x64xf32, #tpu.memory_space<vmem>>, vector<64x64xf32>
    %cst = arith.constant dense<0.000000e+00> : vector<152x64xf32>
    %2 = tpu.matmul %0, %1, %cst {dimension_numbers = #tpu.dot_dimension_numbers<[1], [0], [0], [1], [0, 0, 1, 1], [], []>} : vector<152x64xf32>, vector<64x64xf32>, vector<152x64xf32> -> vector<152x64xf32>
    %c0_3 = arith.constant 0 : index
    %c0_4 = arith.constant 0 : index
    %3 = vector.load %arg3[%c0_3, %c0_4] : memref<1x64xf32, #tpu.memory_space<vmem>>, vector<1x64xf32>
    %4 = vector.broadcast %3 : vector<1x64xf32> to vector<152x64xf32>
    %5 = arith.addf %2, %4 : vector<152x64xf32>
    %6 = tpu.iota {dimensions = array<i32: 1>} : vector<152x64xi32>
    %c32_i32 = arith.constant 32 : i32
    %7 = vector.broadcast %c32_i32 : i32 to vector<152x64xi32>
    %8 = arith.cmpi slt, %6, %7 : vector<152x64xi32>
    %9 = arith.mulf %5, %5 : vector<152x64xf32>
    %cst_5 = arith.constant dense<0.000000e+00> : vector<152xf32>
    %10 = vector.multi_reduction <add>, %9, %cst_5 [1] : vector<152x64xf32> to vector<152xf32>
    %11 = vector.shape_cast %10 : vector<152xf32> to vector<152x1xf32>
    %cst_6 = arith.constant 0.000000e+00 : f32
    %12 = vector.broadcast %cst_6 : f32 to vector<152x64xf32>
    %13 = arith.select %8, %9, %12 : vector<152x64xi1>, vector<152x64xf32>
    %cst_7 = arith.constant dense<0.000000e+00> : vector<152xf32>
    %14 = vector.multi_reduction <add>, %13, %cst_7 [1] : vector<152x64xf32> to vector<152xf32>
    %15 = vector.shape_cast %14 : vector<152xf32> to vector<152x1xf32>
    %16 = arith.subf %11, %15 : vector<152x1xf32>
    %cst_8 = arith.constant 1.000000e-24 : f32
    %17 = vector.broadcast %cst_8 : f32 to vector<152x1xf32>
    %18 = arith.maximumf %15, %17 : vector<152x1xf32>
    %19 = math.rsqrt %18 : vector<152x1xf32>
    %cst_9 = arith.constant 1.000000e-24 : f32
    %20 = vector.broadcast %cst_9 : f32 to vector<152x1xf32>
    %21 = arith.maximumf %16, %20 : vector<152x1xf32>
    %22 = math.rsqrt %21 : vector<152x1xf32>
    %23 = vector.shape_cast %19 : vector<152x1xf32> to vector<152x1xf32>
    %24 = vector.broadcast %23 : vector<152x1xf32> to vector<152x64xf32>
    %25 = vector.shape_cast %22 : vector<152x1xf32> to vector<152x1xf32>
    %26 = vector.broadcast %25 : vector<152x1xf32> to vector<152x64xf32>
    %27 = arith.select %8, %24, %26 : vector<152x64xi1>, vector<152x64xf32>
    %28 = arith.mulf %5, %27 : vector<152x64xf32>
    %29 = vector.extract_strided_slice %28 {offsets = [0, 0], sizes = [152, 32], strides = [1, 1]} : vector<152x64xf32> to vector<152x32xf32>
    %c0_10 = arith.constant 0 : index
    %c0_11 = arith.constant 0 : index
    %30 = vector.load %arg4[%c0_10, %c0_11] : memref<152x32xf32, #tpu.memory_space<vmem>>, vector<152x32xf32>
    tpu.vector_store %arg4[%c0_10, %c0_11], %29 {strides = array<i32>} : memref<152x32xf32, #tpu.memory_space<vmem>>, vector<152x32xf32>,
    %31 = vector.extract_strided_slice %28 {offsets = [0, 32], sizes = [152, 32], strides = [1, 1]} : vector<152x64xf32> to vector<152x32xf32>
    %c0_12 = arith.constant 0 : index
    %c0_13 = arith.constant 0 : index
    %32 = vector.load %arg5[%c0_12, %c0_13] : memref<152x32xf32, #tpu.memory_space<vmem>>, vector<152x32xf32>
    tpu.vector_store %arg5[%c0_12, %c0_13], %31 {strides = array<i32>} : memref<152x32xf32, #tpu.memory_space<vmem>>, vector<152x32xf32>,
    return
  }
  func.func @transform_0(%arg0: i32) -> (i32, i32) {
    %c0_i32 = arith.constant 0 : i32
    %c0_i32_0 = arith.constant 0 : i32
    return %arg0, %c0_i32 : i32, i32
  }
  func.func @transform_1(%arg0: i32) -> (i32, i32) {
    %c0_i32 = arith.constant 0 : i32
    %c0_i32_0 = arith.constant 0 : i32
    %c0_i32_1 = arith.constant 0 : i32
    return %c0_i32, %c0_i32_0 : i32, i32
  }
  func.func @transform_2(%arg0: i32) -> (i32, i32) {
    %c0_i32 = arith.constant 0 : i32
    %c0_i32_0 = arith.constant 0 : i32
    %c0_i32_1 = arith.constant 0 : i32
    return %c0_i32, %c0_i32_0 : i32, i32
  }
  func.func @transform_3(%arg0: i32) -> (i32, i32) {
    %c0_i32 = arith.constant 0 : i32
    %c0_i32_0 = arith.constant 0 : i32
    return %arg0, %c0_i32 : i32, i32
  }
  func.func @transform_4(%arg0: i32) -> (i32, i32) {
    %c0_i32 = arith.constant 0 : i32
    %c0_i32_0 = arith.constant 0 : i32
    return %arg0, %c0_i32 : i32, i32
  }
}

module attributes {stable_mosaic.version = 11 : i64} {
  func.func @_encoder_kernel(%arg0: i32, %arg1: memref<152x64xf32, #tpu.memory_space<vmem>>, %arg2: memref<64x64xf32, #tpu.memory_space<vmem>>, %arg3: memref<1x64xf32, #tpu.memory_space<vmem>>, %arg4: memref<152x32xf32, #tpu.memory_space<vmem>>, %arg5: memref<152x32xf32, #tpu.memory_space<vmem>>) attributes {dimension_semantics = [#tpu.dimension_semantics<parallel>], iteration_bounds = array<i64: 2>, scalar_prefetch = 0 : i64, scratch_operands = 0 : i64, tpu.core_type = #tpu.core_type<tc>, window_params = [{transform_indices = @transform_0, window_bounds = array<i64: 152, 64>}, {pipeline_mode = #tpu.pipeline_mode<synchronous>, transform_indices = @transform_1, window_bounds = array<i64: 64, 64>}, {pipeline_mode = #tpu.pipeline_mode<synchronous>, transform_indices = @transform_2, window_bounds = array<i64: 1, 64>}, {transform_indices = @transform_3, window_bounds = array<i64: 152, 32>}, {transform_indices = @transform_4, window_bounds = array<i64: 152, 32>}]} {
    %c0 = arith.constant 0 : index
    %c0_0 = arith.constant 0 : index
    %0 = vector.load %arg1[%c0, %c0_0] : memref<152x64xf32, #tpu.memory_space<vmem>>, vector<152x64xf32>
    %c0_1 = arith.constant 0 : index
    %c0_2 = arith.constant 0 : index
    %1 = vector.load %arg2[%c0_1, %c0_2] : memref<64x64xf32, #tpu.memory_space<vmem>>, vector<64x64xf32>
    %cst = arith.constant dense<0.000000e+00> : vector<152x64xf32>
    %2 = tpu.matmul %0, %1, %cst {dimension_numbers = #tpu.dot_dimension_numbers<[1], [0], [0], [1], [0, 0, 1, 1], [], []>} : vector<152x64xf32>, vector<64x64xf32>, vector<152x64xf32> -> vector<152x64xf32>
    %c0_3 = arith.constant 0 : index
    %c0_4 = arith.constant 0 : index
    %3 = vector.load %arg3[%c0_3, %c0_4] : memref<1x64xf32, #tpu.memory_space<vmem>>, vector<1x64xf32>
    %4 = vector.broadcast %3 : vector<1x64xf32> to vector<152x64xf32>
    %5 = arith.addf %2, %4 : vector<152x64xf32>
    %6 = tpu.iota {dimensions = array<i32: 1>} : vector<152x64xi32>
    %c32_i32 = arith.constant 32 : i32
    %7 = vector.broadcast %c32_i32 : i32 to vector<152x64xi32>
    %8 = arith.cmpi slt, %6, %7 : vector<152x64xi32>
    %9 = arith.mulf %5, %5 : vector<152x64xf32>
    %cst_5 = arith.constant dense<0.000000e+00> : vector<152xf32>
    %10 = vector.multi_reduction <add>, %9, %cst_5 [1] : vector<152x64xf32> to vector<152xf32>
    %11 = vector.shape_cast %10 : vector<152xf32> to vector<152x1xf32>
    %cst_6 = arith.constant 0.000000e+00 : f32
    %12 = vector.broadcast %cst_6 : f32 to vector<152x64xf32>
    %13 = arith.select %8, %9, %12 : vector<152x64xi1>, vector<152x64xf32>
    %cst_7 = arith.constant dense<0.000000e+00> : vector<152xf32>
    %14 = vector.multi_reduction <add>, %13, %cst_7 [1] : vector<152x64xf32> to vector<152xf32>
    %15 = vector.shape_cast %14 : vector<152xf32> to vector<152x1xf32>
    %16 = arith.subf %11, %15 : vector<152x1xf32>
    %cst_8 = arith.constant 1.000000e-24 : f32
    %17 = vector.broadcast %cst_8 : f32 to vector<152x1xf32>
    %18 = arith.maximumf %15, %17 : vector<152x1xf32>
    %19 = math.rsqrt %18 : vector<152x1xf32>
    %cst_9 = arith.constant 1.000000e-24 : f32
    %20 = vector.broadcast %cst_9 : f32 to vector<152x1xf32>
    %21 = arith.maximumf %16, %20 : vector<152x1xf32>
    %22 = math.rsqrt %21 : vector<152x1xf32>
    %23 = vector.shape_cast %19 : vector<152x1xf32> to vector<152x1xf32>
    %24 = vector.broadcast %23 : vector<152x1xf32> to vector<152x64xf32>
    %25 = vector.shape_cast %22 : vector<152x1xf32> to vector<152x1xf32>
    %26 = vector.broadcast %25 : vector<152x1xf32> to vector<152x64xf32>
    %27 = arith.select %8, %24, %26 : vector<152x64xi1>, vector<152x64xf32>
    %28 = arith.mulf %5, %27 : vector<152x64xf32>
    %29 = vector.extract_strided_slice %28 {offsets = [0, 0], sizes = [152, 32], strides = [1, 1]} : vector<152x64xf32> to vector<152x32xf32>
    %c0_10 = arith.constant 0 : index
    %c0_11 = arith.constant 0 : index
    %30 = vector.load %arg4[%c0_10, %c0_11] : memref<152x32xf32, #tpu.memory_space<vmem>>, vector<152x32xf32>
    tpu.vector_store %arg4[%c0_10, %c0_11], %29 {strides = array<i32>} : memref<152x32xf32, #tpu.memory_space<vmem>>, vector<152x32xf32>,
    %31 = vector.extract_strided_slice %28 {offsets = [0, 32], sizes = [152, 32], strides = [1, 1]} : vector<152x64xf32> to vector<152x32xf32>
    %c0_12 = arith.constant 0 : index
    %c0_13 = arith.constant 0 : index
    %32 = vector.load %arg5[%c0_12, %c0_13] : memref<152x32xf32, #tpu.memory_space<vmem>>, vector<152x32xf32>
    tpu.vector_store %arg5[%c0_12, %c0_13], %31 {strides = array<i32>} : memref<152x32xf32, #tpu.memory_space<vmem>>, vector<152x32xf32>,
    return
  }
  func.func @transform_0(%arg0: i32) -> (i32, i32) {
    %c0_i32 = arith.constant 0 : i32
    %c0_i32_0 = arith.constant 0 : i32
    return %arg0, %c0_i32 : i32, i32
  }
  func.func @transform_1(%arg0: i32) -> (i32, i32) {
    %c0_i32 = arith.constant 0 : i32
    %c0_i32_0 = arith.constant 0 : i32
    %c0_i32_1 = arith.constant 0 : i32
    return %c0_i32, %c0_i32_0 : i32, i32
  }
  func.func @transform_2(%arg0: i32) -> (i32, i32) {
    %c0_i32 = arith.constant 0 : i32
    %c0_i32_0 = arith.constant 0 : i32
    %c0_i32_1 = arith.constant 0 : i32
    return %c0_i32, %c0_i32_0 : i32, i32
  }
  func.func @transform_3(%arg0: i32) -> (i32, i32) {
    %c0_i32 = arith.constant 0 : i32
    %c0_i32_0 = arith.constant 0 : i32
    return %arg0, %c0_i32 : i32, i32
  }
  func.func @transform_4(%arg0: i32) -> (i32, i32) {
    %c0_i32 = arith.constant 0 : i32
    %c0_i32_0 = arith.constant 0 : i32
    return %arg0, %c0_i32 : i32, i32
  }
}

</mosaic_0001>

<llo_original>
// kernel: tpu_custom_call.1
$region0: #{tpu_custom_call.1}
  #allocation0 [shape = 'u32[]', space=smem, size = 0x4, offset = 0x4, fixed_abs, tag = 'smem constant byte address 0x4 - core index']
  #allocation1 [shape = 'u32[144,128]{1,0:T(1,128)}', space=vmem, size = 0x12000, scoped, tag = 'internal scratch']
  %s0 = inlined_call_operand.vmem [shape: f32[304,64], index: 0, kind: input, shape index: {}]
  %s1 = inlined_call_operand.vmem [shape: f32[64,64], index: 1, kind: input, shape index: {}]
  %s2 = inlined_call_operand.vmem [shape: f32[1,64], index: 2, kind: input, shape index: {}]
  %s3 = inlined_call_operand.vmem [shape: f32[304,32], index: 3, kind: output, shape index: {0}]
  %s4 = inlined_call_operand.vmem [shape: f32[304,32], index: 4, kind: output, shape index: {1}]
  %5 = xla_tuple %s3, %s4
  %s6 = sld [smem:[#allocation0]]
  $region53: #{tpu_custom_call.1} parent=0
    _
  %s8 = ssub.s32 1, %s6
  %s9 = scalar_select 0, %s8, %s6
  loop: start=0, step=1, limit=4
  $region2: #{tpu_custom_call.1} parent=0 // loop_pre_header
    _
  $region3: #{tpu_custom_call.1} parent=0 // loop_header
    %s11 = sphi 0, %s15
    %p12 = scmp.ge.s32.totalorder %s11, 4
    %s21 = sphi 0, %s23
    %s24 = sphi 0, %s21
    %s25 = sphi 0, %s24
    %s41 = sphi 0, %s25
    %s45 = sphi 0, %s45
    %s47 = sphi 0, %s45
    %s48 = sphi 0, %s47
    %s62 = sphi 0, %s48
    %s66 = sphi 0, %s66
    %s68 = sphi 0, %s66
    %s69 = sphi 0, %s68
    %s83 = sphi 0, %s69
    %s89 = sphi 0, %s91
    %s92 = sphi 0, %s89
    %s93 = sphi 0, %s92
    %s109 = sphi 0, %s93
    %s115 = sphi 0, %s117
    %s118 = sphi 0, %s115
    %s119 = sphi 0, %s118
    %s135 = sphi 0, %s119
  $region4: #{tpu_custom_call.1} parent=0 // loop_header_branch
    %14 = sbr.rel (%p12) target = $region8
  $region5: #{tpu_custom_call.1} parent=0 // loop_body
    %s16 = ssub.s32 %s11, 1
    %s17 = ssub.s32 %s11, 2
    %s18 = sadd.s32 %s11, 1
    %s19 = ssub.s32 %s11, %s18
    %p20 = scmp.eq.s32.totalorder %s19, 0
    %s22 = sadd.s32 %s21, 1
    %s23 = scalar_select %p20, %s21, %s22
    %p26 = pneg %p20
    %p27 = scmp.eq.s32.totalorder %s11, 1
    %p28 = por %p26, %p27
    %p29 = scmp.ne.s32.totalorder %s21, %s24
    %p30 = scmp.eq.s32.totalorder %s11, 0
    %p31 = por %p29, %p30
    %p32 = scmp.ne.s32.totalorder %s21, %s24
    %p33 = scmp.eq.s32.totalorder %s16, 1
    %p34 = por %p32, %p33
    %p35 = scmp.ne.s32.totalorder %s24, %s25
    %p36 = scmp.eq.s32.totalorder %s16, 0
    %p37 = por %p35, %p36
    %p38 = scmp.ne.s32.totalorder %s24, %s25
    %p39 = scmp.eq.s32.totalorder %s17, 1
    %p40 = por %p38, %p39
    %p42 = scmp.ne.s32.totalorder %s25, %s41
    %p43 = scmp.eq.s32.totalorder %s17, 0
    %p44 = por %p42, %p43
    %s46 = sadd.s32 %s45, 1
    %p49 = scmp.eq.s32.totalorder %s11, 1
    %p50 = scmp.ne.s32.totalorder %s45, %s47
    %p51 = scmp.eq.s32.totalorder %s11, 0
    %p52 = por %p50, %p51
    %p53 = scmp.ne.s32.totalorder %s45, %s47
    %p54 = scmp.eq.s32.totalorder %s16, 1
    %p55 = por %p53, %p54
    %p56 = scmp.ne.s32.totalorder %s47, %s48
    %p57 = scmp.eq.s32.totalorder %s16, 0
    %p58 = por %p56, %p57
    %p59 = scmp.ne.s32.totalorder %s47, %s48
    %p60 = scmp.eq.s32.totalorder %s17, 1
    %p61 = por %p59, %p60
    %p63 = scmp.ne.s32.totalorder %s48, %s62
    %p64 = scmp.eq.s32.totalorder %s17, 0
    %p65 = por %p63, %p64
    %s67 = sadd.s32 %s66, 1
    %p70 = scmp.eq.s32.totalorder %s11, 1
    %p71 = scmp.ne.s32.totalorder %s66, %s68
    %p72 = scmp.eq.s32.totalorder %s11, 0
    %p73 = por %p71, %p72
    %p74 = scmp.ne.s32.totalorder %s66, %s68
    %p75 = scmp.eq.s32.totalorder %s16, 1
    %p76 = por %p74, %p75
    %p77 = scmp.ne.s32.totalorder %s68, %s69
    %p78 = scmp.eq.s32.totalorder %s16, 0
    %p79 = por %p77, %p78
    %p80 = scmp.ne.s32.totalorder %s68, %s69
    %p81 = scmp.eq.s32.totalorder %s17, 1
    %p82 = por %p80, %p81
    %p84 = scmp.ne.s32.totalorder %s69, %s83
    %p85 = scmp.eq.s32.totalorder %s17, 0
    %p86 = por %p84, %p85
    %s87 = ssub.s32 %s11, %s18
    %p88 = scmp.eq.s32.totalorder %s87, 0
    %s90 = sadd.s32 %s89, 1
    %s91 = scalar_select %p88, %s89, %s90
    %p94 = pneg %p88
    %p95 = scmp.eq.s32.totalorder %s11, 1
    %p96 = por %p94, %p95
    %p97 = scmp.ne.s32.totalorder %s89, %s92
    %p98 = scmp.eq.s32.totalorder %s11, 0
    %p99 = por %p97, %p98
    %p100 = scmp.ne.s32.totalorder %s89, %s92
    %p101 = scmp.eq.s32.totalorder %s16, 1
    %p102 = por %p100, %p101
    %p103 = scmp.ne.s32.totalorder %s92, %s93
    %p104 = scmp.eq.s32.totalorder %s16, 0
    %p105 = por %p103, %p104
    %p106 = scmp.ne.s32.totalorder %s92, %s93
    %p107 = scmp.eq.s32.totalorder %s17, 1
    %p108 = por %p106, %p107
    %p110 = scmp.ne.s32.totalorder %s93, %s109
    %p111 = scmp.eq.s32.totalorder %s17, 0
    %p112 = por %p110, %p111
    %s113 = ssub.s32 %s11, %s18
    %p114 = scmp.eq.s32.totalorder %s113, 0
    %s116 = sadd.s32 %s115, 1
    %s117 = scalar_select %p114, %s115, %s116
    %p120 = pneg %p114
    %p121 = scmp.eq.s32.totalorder %s11, 1
    %p122 = por %p120, %p121
    %p123 = scmp.ne.s32.totalorder %s115, %s118
    %p124 = scmp.eq.s32.totalorder %s11, 0
    %p125 = por %p123, %p124
    %p126 = scmp.ne.s32.totalorder %s115, %s118
    %p127 = scmp.eq.s32.totalorder %s16, 1
    %p128 = por %p126, %p127
    %p129 = scmp.ne.s32.totalorder %s118, %s119
    %p130 = scmp.eq.s32.totalorder %s16, 0
    %p131 = por %p129, %p130
    %p132 = scmp.ne.s32.totalorder %s118, %s119
    %p133 = scmp.eq.s32.totalorder %s17, 1
    %p134 = por %p132, %p133
    %p136 = scmp.ne.s32.totalorder %s119, %s135
    %p137 = scmp.eq.s32.totalorder %s17, 0
    %p138 = por %p136, %p137
    %p139 = scmp.le.s32.totalorder 1, %s11
    %p140 = scmp.lt.s32.totalorder %s11, 3
    %p141 = pnand %p139, %p140
    %p142 = pneg %p141
    // Predicated region
    $region9: #{tpu_custom_call.1} parent=5 // pred_check
      _
    $region10: #{tpu_custom_call.1} parent=5 // pred_check_branch
      %144 = sbr.rel (%p141) target = $region12
    $region11: #{tpu_custom_call.1} parent=5 // pred_region
      %s145 = ssub.s32 %s11, 1
      // Predicated region
      $region13: #{tpu_custom_call.1} parent=11 // pred_check
        %p146 = pneg %p58
      $region14: #{tpu_custom_call.1} parent=11 // pred_check_branch
        %148 = sbr.rel (%p146) target = $region16
      $region15: #{tpu_custom_call.1} parent=11 // pred_region
        _
      $region16: #{tpu_custom_call.1} parent=11 // pred_fallthru
        _
      // Predicated region
      $region17: #{tpu_custom_call.1} parent=11 // pred_check
        %p149 = pneg %p79
      $region18: #{tpu_custom_call.1} parent=11 // pred_check_branch
        %151 = sbr.rel (%p149) target = $region20
      $region19: #{tpu_custom_call.1} parent=11 // pred_region
        _
      $region20: #{tpu_custom_call.1} parent=11 // pred_fallthru
        _
    $region12: #{tpu_custom_call.1} parent=5 // pred_fallthru
      _
    %p152 = scmp.lt.s32.totalorder %s11, 2
    // Predicated region
    $region21: #{tpu_custom_call.1} parent=5 // pred_check
      %p153 = pneg %p152
    $region22: #{tpu_custom_call.1} parent=5 // pred_check_branch
      %155 = sbr.rel (%p153) target = $region24
    $region23: #{tpu_custom_call.1} parent=5 // pred_region
      // Predicated region
      $region25: #{tpu_custom_call.1} parent=23 // pred_check
        %p156 = pneg %p31
      $region26: #{tpu_custom_call.1} parent=23 // pred_check_branch
        %158 = sbr.rel (%p156) target = $region28
      $region27: #{tpu_custom_call.1} parent=23 // pred_region
        %s159 = smul.u32 19, %s11
        %p160 = scmp.lt.s32.totalorder %s159, 37
        %s161 = scalar_select %p160, %s159, 37
        %s162 = smul.addr %s161, 8
        %s163 = scalar_lea.vmem %s0, %s162
        %s164 = smul.u32 19, %s11
      $region28: #{tpu_custom_call.1} parent=23 // pred_fallthru
        _
    $region24: #{tpu_custom_call.1} parent=5 // pred_fallthru
      _
    %p165 = scmp.le.s32.totalorder 1, %s11
    %p166 = scmp.lt.s32.totalorder %s11, 3
    %p167 = pnand %p165, %p166
    %p168 = pneg %p167
    // Predicated region
    $region29: #{tpu_custom_call.1} parent=5 // pred_check
      _
    $region30: #{tpu_custom_call.1} parent=5 // pred_check_branch
      %170 = sbr.rel (%p167) target = $region32
    $region31: #{tpu_custom_call.1} parent=5 // pred_region
      %s171 = ssub.s32 %s11, 1
      %s172 = smul.u32 19, %s16
      %p173 = scmp.lt.s32.totalorder %s172, 37
      %s174 = scalar_select %p173, %s172, 37
      %s175 = smul.addr %s174, 8
      %s176 = scalar_lea.vmem %s0, %s175
      %p177 = pneg %p37
      %p178 = pneg %p34
      %p179 = pneg %p58
      %p180 = pneg %p55
      %p181 = pneg %p79
      %p182 = pneg %p76
      %p183 = pneg %p105
      %p184 = pneg %p102
      %s185 = smul.u32 19, %s16
      %p186 = scmp.lt.s32.totalorder %s185, 37
      %s187 = scalar_select %p186, %s185, 37
      %s188 = smul.addr %s187, 8
      %s189 = scalar_lea.vmem %s3, %s188
      %p190 = pneg %p131
      %p191 = pneg %p128
      %s192 = smul.u32 19, %s16
      %p193 = scmp.lt.s32.totalorder %s192, 37
      %s194 = scalar_select %p193, %s192, 37
      %s195 = smul.addr %s194, 8
      %s196 = scalar_lea.vmem %s4, %s195
      %s197 = smul.u32 19, %s16
      %p198 = scmp.lt.s32.totalorder %s197, 37
      %s199 = scalar_select %p198, %s197, 37
      %s200 = smul.addr %s199, 8
      %s201 = scalar_lea.vmem %s0, %s200
      %s202 = smul.u32 19, %s16
      %s203 = smul.u32 19, %s16
      %p204 = scmp.lt.s32.totalorder %s203, 37
      %s205 = scalar_select %p204, %s203, 37
      %s206 = smul.addr %s205, 8
      %s207 = scalar_lea.vmem %s3, %s206
      %s208 = smul.u32 19, %s16
      %s209 = smul.u32 19, %s16
      %p210 = scmp.lt.s32.totalorder %s209, 37
      %s211 = scalar_select %p210, %s209, 37
      %s212 = smul.addr %s211, 8
      %s213 = scalar_lea.vmem %s4, %s212
      %s214 = smul.u32 19, %s16
      %v215 = vld [vmem:[%s201] sm:$0xff]
      %v216 = vld [vmem:[%s201 + $0x8] sm:$0xff]
      %v217 = vld [vmem:[%s201 + $0x10] sm:$0xff]
      %v218 = vld [vmem:[%s201 + $0x18] sm:$0xff]
      %v219 = vld [vmem:[%s201 + $0x20] sm:$0xff]
      %v220 = vld [vmem:[%s201 + $0x28] sm:$0xff]
      %v221 = vld [vmem:[%s201 + $0x30] sm:$0xff]
      %v222 = vld [vmem:[%s201 + $0x38] sm:$0xff]
      %v223 = vld [vmem:[%s201 + $0x40] sm:$0xff]
      %v224 = vld [vmem:[%s201 + $0x48] sm:$0xff]
      %v225 = vld [vmem:[%s201 + $0x50] sm:$0xff]
      %v226 = vld [vmem:[%s201 + $0x58] sm:$0xff]
      %v227 = vld [vmem:[%s201 + $0x60] sm:$0xff]
      %v228 = vld [vmem:[%s201 + $0x68] sm:$0xff]
      %v229 = vld [vmem:[%s201 + $0x70] sm:$0xff]
      %v230 = vld [vmem:[%s201 + $0x78] sm:$0xff]
      %v231 = vld [vmem:[%s201 + $0x80] sm:$0xff]
      %v232 = vld [vmem:[%s201 + $0x88] sm:$0xff]
      %v233 = vld [vmem:[%s201 + $0x90] sm:$0xff]
      %v234 = vld [vmem:[%s1] sm:$0xff]
      %v235 = vld [vmem:[%s1 + $0x8] sm:$0xff]
      %v236 = vld [vmem:[%s1 + $0x10] sm:$0xff]
      %v237 = vld [vmem:[%s1 + $0x18] sm:$0xff]
      %v238 = vld [vmem:[%s1 + $0x20] sm:$0xff]
      %v239 = vld [vmem:[%s1 + $0x28] sm:$0xff]
      %v240 = vld [vmem:[%s1 + $0x30] sm:$0xff]
      %v241 = vld [vmem:[%s1 + $0x38] sm:$0xff]
      %v242 = vld [vmem:[%s2] sm:$0x1]
      %v244 = vlaneseq
      %v245 = vshrl.u32 %v244, 7
      %v246 = vsub.s32 0, %v245
      %v247 = vrot.slane %v242, %v246
      %vm249 = vcmask 523264
      %v251 = vsel %vm249, %v215, 0
      %v254 = vsel %vm249, %v216, 0
      %v257 = vsel %vm249, %v217, 0
      %v260 = vsel %vm249, %v218, 0
      %v263 = vsel %vm249, %v219, 0
      %v266 = vsel %vm249, %v220, 0
      %v269 = vsel %vm249, %v221, 0
      %v272 = vsel %vm249, %v222, 0
      %v275 = vsel %vm249, %v223, 0
      %v278 = vsel %vm249, %v224, 0
      %v281 = vsel %vm249, %v225, 0
      %v284 = vsel %vm249, %v226, 0
      %v287 = vsel %vm249, %v227, 0
      %v290 = vsel %vm249, %v228, 0
      %v293 = vsel %vm249, %v229, 0
      %v296 = vsel %vm249, %v230, 0
      %v299 = vsel %vm249, %v231, 0
      %v302 = vsel %vm249, %v232, 0
      %v305 = vsel %vm249, %v233, 0
      %307 = vmatprep.subr.mxu0 0.0
      %308 = vmatpush1.msra.mxu0 %v234
      %309 = vmatprep.subr.mxu0 0.0
      %310 = vmatpush1.msra.mxu0 %v235
      %311 = vmatprep.subr.mxu0 0.0
      %312 = vmatpush1.msra.mxu0 %v236
      %313 = vmatprep.subr.mxu0 0.0
      %314 = vmatpush1.msra.mxu0 %v237
      %315 = vmatprep.subr.mxu0 0.0
      %316 = vmatpush1.msra.mxu0 %v238
      %317 = vmatprep.subr.mxu0 0.0
      %318 = vmatpush1.msra.mxu0 %v239
      %319 = vmatprep.subr.mxu0 0.0
      %320 = vmatpush1.msra.mxu0 %v240
      %321 = vmatprep.subr.mxu0 0.0
      %322 = vmatpush1.msra.mxu0 %v241
      %323 = vmatprep.subr.mxu0 0.0
      %324 = vmatpush1.msra.mxu0 0.0
      %325 = vmatprep.subr.mxu0 0.0
      %326 = vmatpush1.msra.mxu0 0.0
      %327 = vmatprep.subr.mxu0 0.0
      %328 = vmatpush1.msra.mxu0 0.0
      %329 = vmatprep.subr.mxu0 0.0
      %330 = vmatpush1.msra.mxu0 0.0
      %331 = vmatprep.subr.mxu0 0.0
      %332 = vmatpush1.msra.mxu0 0.0
      %333 = vmatprep.subr.mxu0 0.0
      %334 = vmatpush1.msra.mxu0 0.0
      %335 = vmatprep.subr.mxu0 0.0
      %336 = vmatpush1.msra.mxu0 0.0
      %337 = vmatprep.subr.mxu0 0.0
      %338 = vmatpush1.msra.mxu0 0.0
      %339 = vmatprep.subr.mxu0 0.0
      %340 = vmatpush1.msra.mxu0 0.0
      %341 = vmatprep.subr.mxu0 0.0
      %342 = vmatpush1.msra.mxu0 0.0
      %343 = vmatprep.subr.mxu0 0.0
      %344 = vmatpush1.msra.mxu0 0.0
      %345 = vmatprep.subr.mxu0 0.0
      %346 = vmatpush1.msra.mxu0 0.0
      %347 = vmatprep.subr.mxu0 0.0
      %348 = vmatpush1.msra.mxu0 0.0
      %349 = vmatprep.subr.mxu0 0.0
      %350 = vmatpush1.msra.mxu0 0.0
      %351 = vmatprep.subr.mxu0 0.0
      %352 = vmatpush1.msra.mxu0 0.0
      %353 = vmatprep.subr.mxu0 0.0
      %354 = vmatpush1.msra.mxu0 0.0
      %355 = vmatprep.subr.mxu0 0.0
      %356 = vmatpush1.msra.mxu0 0.0
      %357 = vmatprep.subr.mxu0 0.0
      %358 = vmatpush1.msra.mxu0 0.0
      %359 = vmatprep.subr.mxu0 0.0
      %360 = vmatpush1.msra.mxu0 0.0
      %361 = vmatprep.subr.mxu0 0.0
      %362 = vmatpush1.msra.mxu0 0.0
      %363 = vmatprep.subr.mxu0 0.0
      %364 = vmatpush1.msra.mxu0 0.0
      %365 = vmatprep.subr.mxu0 0.0
      %366 = vmatpush1.msra.mxu0 0.0
      %367 = vmatprep.subr.mxu0 0.0
      %368 = vmatpush1.msra.mxu0 0.0
      %369 = vmatprep.subr.mxu0 0.0
      %370 = vmatpush1.msra.mxu0 0.0
      %371 = vmatprep.mubr.f32.mxu0 0.0
      %372 = vmatmul.mubr.f32.gmra.mrb[0].mxu0 %v251
      %v373 = vpop.f32.mrb[0].mxu0
      %v374 = vadd.f32 %v247, %v373
      %v375 = vpop.f32.mrb[0].mxu0
      %376 = vmatprep.mubr.f32.mxu0 0.0
      %377 = vmatmul.mubr.f32.gmra.mrb[0].mxu0 %v254
      %v378 = vpop.f32.mrb[0].mxu0
      %v379 = vadd.f32 %v247, %v378
      %v380 = vpop.f32.mrb[0].mxu0
      %381 = vmatprep.mubr.f32.mxu0 0.0
      %382 = vmatmul.mubr.f32.gmra.mrb[0].mxu0 %v257
      %v383 = vpop.f32.mrb[0].mxu0
      %v384 = vadd.f32 %v247, %v383
      %v385 = vpop.f32.mrb[0].mxu0
      %386 = vmatprep.mubr.f32.mxu0 0.0
      %387 = vmatmul.mubr.f32.gmra.mrb[0].mxu0 %v260
      %v388 = vpop.f32.mrb[0].mxu0
      %v389 = vadd.f32 %v247, %v388
      %v390 = vpop.f32.mrb[0].mxu0
      %391 = vmatprep.mubr.f32.mxu0 0.0
      %392 = vmatmul.mubr.f32.gmra.mrb[0].mxu0 %v263
      %v393 = vpop.f32.mrb[0].mxu0
      %v394 = vadd.f32 %v247, %v393
      %v395 = vpop.f32.mrb[0].mxu0
      %396 = vmatprep.mubr.f32.mxu0 0.0
      %397 = vmatmul.mubr.f32.gmra.mrb[0].mxu0 %v266
      %v398 = vpop.f32.mrb[0].mxu0
      %v399 = vadd.f32 %v247, %v398
      %v400 = vpop.f32.mrb[0].mxu0
      %401 = vmatprep.mubr.f32.mxu0 0.0
      %402 = vmatmul.mubr.f32.gmra.mrb[0].mxu0 %v269
      %v403 = vpop.f32.mrb[0].mxu0
      %v404 = vadd.f32 %v247, %v403
      %v405 = vpop.f32.mrb[0].mxu0
      %406 = vmatprep.mubr.f32.mxu0 0.0
      %407 = vmatmul.mubr.f32.gmra.mrb[0].mxu0 %v272
      %v408 = vpop.f32.mrb[0].mxu0
      %v409 = vadd.f32 %v247, %v408
      %v410 = vpop.f32.mrb[0].mxu0
      %411 = vmatprep.mubr.f32.mxu0 0.0
      %412 = vmatmul.mubr.f32.gmra.mrb[0].mxu0 %v275
      %v413 = vpop.f32.mrb[0].mxu0
      %v414 = vadd.f32 %v247, %v413
      %v415 = vpop.f32.mrb[0].mxu0
      %416 = vmatprep.mubr.f32.mxu0 0.0
      %417 = vmatmul.mubr.f32.gmra.mrb[0].mxu0 %v278
      %v418 = vpop.f32.mrb[0].mxu0
      %v419 = vadd.f32 %v247, %v418
      %v420 = vpop.f32.mrb[0].mxu0
      %421 = vmatprep.mubr.f32.mxu0 0.0
      %422 = vmatmul.mubr.f32.gmra.mrb[0].mxu0 %v281
      %v423 = vpop.f32.mrb[0].mxu0
      %v424 = vadd.f32 %v247, %v423
      %v425 = vpop.f32.mrb[0].mxu0
      %426 = vmatprep.mubr.f32.mxu0 0.0
      %427 = vmatmul.mubr.f32.gmra.mrb[0].mxu0 %v284
      %v428 = vpop.f32.mrb[0].mxu0
      %v429 = vadd.f32 %v247, %v428
      %v430 = vpop.f32.mrb[0].mxu0
      %431 = vmatprep.mubr.f32.mxu0 0.0
      %432 = vmatmul.mubr.f32.gmra.mrb[0].mxu0 %v287
      %v433 = vpop.f32.mrb[0].mxu0
      %v434 = vadd.f32 %v247, %v433
      %v435 = vpop.f32.mrb[0].mxu0
      %436 = vmatprep.mubr.f32.mxu0 0.0
      %437 = vmatmul.mubr.f32.gmra.mrb[0].mxu0 %v290
      %v438 = vpop.f32.mrb[0].mxu0
      %v439 = vadd.f32 %v247, %v438
      %v440 = vpop.f32.mrb[0].mxu0
      %441 = vmatprep.mubr.f32.mxu0 0.0
      %442 = vmatmul.mubr.f32.gmra.mrb[0].mxu0 %v293
      %v443 = vpop.f32.mrb[0].mxu0
      %v444 = vadd.f32 %v247, %v443
      %v445 = vpop.f32.mrb[0].mxu0
      %446 = vmatprep.mubr.f32.mxu0 0.0
      %447 = vmatmul.mubr.f32.gmra.mrb[0].mxu0 %v296
      %v448 = vpop.f32.mrb[0].mxu0
      %v449 = vadd.f32 %v247, %v448
      %v450 = vpop.f32.mrb[0].mxu0
      %451 = vmatprep.mubr.f32.mxu0 0.0
      %452 = vmatmul.mubr.f32.gmra.mrb[0].mxu0 %v299
      %v453 = vpop.f32.mrb[0].mxu0
      %v454 = vadd.f32 %v247, %v453
      %v455 = vpop.f32.mrb[0].mxu0
      %456 = vmatprep.mubr.f32.mxu0 0.0
      %457 = vmatmul.mubr.f32.gmra.mrb[0].mxu0 %v302
      %v458 = vpop.f32.mrb[0].mxu0
      %v459 = vadd.f32 %v247, %v458
      %v460 = vpop.f32.mrb[0].mxu0
      %461 = vmatprep.mubr.f32.mxu0 0.0
      %462 = vmatmul.mubr.f32.gmra.mrb[0].mxu0 %v305
      %v463 = vpop.f32.mrb[0].mxu0
      %v464 = vadd.f32 %v247, %v463
      %v465 = vpop.f32.mrb[0].mxu0
      %466 = vdwg.mxu0
      %v467 = vlaneseq
      %v468 = vand.u32 %v467, 127
      %vm469 = vcmp.lt.s32.totalorder %v468, 32
      %v470 = vmul.f32 %v374, %v374
      %v471 = vmul.f32 %v379, %v379
      %v472 = vmul.f32 %v384, %v384
      %v473 = vmul.f32 %v389, %v389
      %v474 = vmul.f32 %v394, %v394
      %v475 = vmul.f32 %v399, %v399
      %v476 = vmul.f32 %v404, %v404
      %v477 = vmul.f32 %v409, %v409
      %v478 = vmul.f32 %v414, %v414
      %v479 = vmul.f32 %v419, %v419
      %v480 = vmul.f32 %v424, %v424
      %v481 = vmul.f32 %v429, %v429
      %v482 = vmul.f32 %v434, %v434
      %v483 = vmul.f32 %v439, %v439
      %v484 = vmul.f32 %v444, %v444
      %v485 = vmul.f32 %v449, %v449
      %v486 = vmul.f32 %v454, %v454
      %v487 = vmul.f32 %v459, %v459
      %v488 = vmul.f32 %v464, %v464
      %v489 = vsel %vm249, %v470, 0.0
      %490 = vadd.xlane.f32.xlu0 %v489
      %v491 = vpop.xlane.xlu0 %490
      %v492 = vsel %vm249, %v471, 0.0
      %493 = vadd.xlane.f32.xlu0 %v492
      %v494 = vpop.xlane.xlu0 %493
      %v495 = vsel %vm249, %v472, 0.0
      %496 = vadd.xlane.f32.xlu0 %v495
      %v497 = vpop.xlane.xlu0 %496
      %v498 = vsel %vm249, %v473, 0.0
      %499 = vadd.xlane.f32.xlu0 %v498
      %v500 = vpop.xlane.xlu0 %499
      %v501 = vsel %vm249, %v474, 0.0
      %502 = vadd.xlane.f32.xlu0 %v501
      %v503 = vpop.xlane.xlu0 %502
      %v504 = vsel %vm249, %v475, 0.0
      %505 = vadd.xlane.f32.xlu0 %v504
      %v506 = vpop.xlane.xlu0 %505
      %v507 = vsel %vm249, %v476, 0.0
      %508 = vadd.xlane.f32.xlu0 %v507
      %v509 = vpop.xlane.xlu0 %508
      %v510 = vsel %vm249, %v477, 0.0
      %511 = vadd.xlane.f32.xlu0 %v510
      %v512 = vpop.xlane.xlu0 %511
      %v513 = vsel %vm249, %v478, 0.0
      %514 = vadd.xlane.f32.xlu0 %v513
      %v515 = vpop.xlane.xlu0 %514
      %v516 = vsel %vm249, %v479, 0.0
      %517 = vadd.xlane.f32.xlu0 %v516
      %v518 = vpop.xlane.xlu0 %517
      %v519 = vsel %vm249, %v480, 0.0
      %520 = vadd.xlane.f32.xlu0 %v519
      %v521 = vpop.xlane.xlu0 %520
      %v522 = vsel %vm249, %v481, 0.0
      %523 = vadd.xlane.f32.xlu0 %v522
      %v524 = vpop.xlane.xlu0 %523
      %v525 = vsel %vm249, %v482, 0.0
      %526 = vadd.xlane.f32.xlu0 %v525
      %v527 = vpop.xlane.xlu0 %526
      %v528 = vsel %vm249, %v483, 0.0
      %529 = vadd.xlane.f32.xlu0 %v528
      %v530 = vpop.xlane.xlu0 %529
      %v531 = vsel %vm249, %v484, 0.0
      %532 = vadd.xlane.f32.xlu0 %v531
      %v533 = vpop.xlane.xlu0 %532
      %v534 = vsel %vm249, %v485, 0.0
      %535 = vadd.xlane.f32.xlu0 %v534
      %v536 = vpop.xlane.xlu0 %535
      %v537 = vsel %vm249, %v486, 0.0
      %538 = vadd.xlane.f32.xlu0 %v537
      %v539 = vpop.xlane.xlu0 %538
      %v540 = vsel %vm249, %v487, 0.0
      %541 = vadd.xlane.f32.xlu0 %v540
      %v542 = vpop.xlane.xlu0 %541
      %v543 = vsel %vm249, %v488, 0.0
      %544 = vadd.xlane.f32.xlu0 %v543
      %v545 = vpop.xlane.xlu0 %544
      %v546 = vsel %vm469, %v470, 0.0
      %v547 = vsel %vm469, %v471, 0.0
      %v548 = vsel %vm469, %v472, 0.0
      %v549 = vsel %vm469, %v473, 0.0
      %v550 = vsel %vm469, %v474, 0.0
      %v551 = vsel %vm469, %v475, 0.0
      %v552 = vsel %vm469, %v476, 0.0
      %v553 = vsel %vm469, %v477, 0.0
      %v554 = vsel %vm469, %v478, 0.0
      %v555 = vsel %vm469, %v479, 0.0
      %v556 = vsel %vm469, %v480, 0.0
      %v557 = vsel %vm469, %v481, 0.0
      %v558 = vsel %vm469, %v482, 0.0
      %v559 = vsel %vm469, %v483, 0.0
      %v560 = vsel %vm469, %v484, 0.0
      %v561 = vsel %vm469, %v485, 0.0
      %v562 = vsel %vm469, %v486, 0.0
      %v563 = vsel %vm469, %v487, 0.0
      %v564 = vsel %vm469, %v488, 0.0
      %v565 = vsel %vm249, %v546, 0.0
      %566 = vadd.xlane.f32.xlu0 %v565
      %v567 = vpop.xlane.xlu0 %566
      %v568 = vsel %vm249, %v547, 0.0
      %569 = vadd.xlane.f32.xlu0 %v568
      %v570 = vpop.xlane.xlu0 %569
      %v571 = vsel %vm249, %v548, 0.0
      %572 = vadd.xlane.f32.xlu0 %v571
      %v573 = vpop.xlane.xlu0 %572
      %v574 = vsel %vm249, %v549, 0.0
      %575 = vadd.xlane.f32.xlu0 %v574
      %v576 = vpop.xlane.xlu0 %575
      %v577 = vsel %vm249, %v550, 0.0
      %578 = vadd.xlane.f32.xlu0 %v577
      %v579 = vpop.xlane.xlu0 %578
      %v580 = vsel %vm249, %v551, 0.0
      %581 = vadd.xlane.f32.xlu0 %v580
      %v582 = vpop.xlane.xlu0 %581
      %v583 = vsel %vm249, %v552, 0.0
      %584 = vadd.xlane.f32.xlu0 %v583
      %v585 = vpop.xlane.xlu0 %584
      %v586 = vsel %vm249, %v553, 0.0
      %587 = vadd.xlane.f32.xlu0 %v586
      %v588 = vpop.xlane.xlu0 %587
      %v589 = vsel %vm249, %v554, 0.0
      %590 = vadd.xlane.f32.xlu0 %v589
      %v591 = vpop.xlane.xlu0 %590
      %v592 = vsel %vm249, %v555, 0.0
      %593 = vadd.xlane.f32.xlu0 %v592
      %v594 = vpop.xlane.xlu0 %593
      %v595 = vsel %vm249, %v556, 0.0
      %596 = vadd.xlane.f32.xlu0 %v595
      %v597 = vpop.xlane.xlu0 %596
      %v598 = vsel %vm249, %v557, 0.0
      %599 = vadd.xlane.f32.xlu0 %v598
      %v600 = vpop.xlane.xlu0 %599
      %v601 = vsel %vm249, %v558, 0.0
      %602 = vadd.xlane.f32.xlu0 %v601
      %v603 = vpop.xlane.xlu0 %602
      %v604 = vsel %vm249, %v559, 0.0
      %605 = vadd.xlane.f32.xlu0 %v604
      %v606 = vpop.xlane.xlu0 %605
      %v607 = vsel %vm249, %v560, 0.0
      %608 = vadd.xlane.f32.xlu0 %v607
      %v609 = vpop.xlane.xlu0 %608
      %v610 = vsel %vm249, %v561, 0.0
      %611 = vadd.xlane.f32.xlu0 %v610
      %v612 = vpop.xlane.xlu0 %611
      %v613 = vsel %vm249, %v562, 0.0
      %614 = vadd.xlane.f32.xlu0 %v613
      %v615 = vpop.xlane.xlu0 %614
      %v616 = vsel %vm249, %v563, 0.0
      %617 = vadd.xlane.f32.xlu0 %v616
      %v618 = vpop.xlane.xlu0 %617
      %v619 = vsel %vm249, %v564, 0.0
      %620 = vadd.xlane.f32.xlu0 %v619
      %v621 = vpop.xlane.xlu0 %620
      %v622 = vsub.f32 %v491, %v567
      %v623 = vsub.f32 %v494, %v570
      %v624 = vsub.f32 %v497, %v573
      %v625 = vsub.f32 %v500, %v576
      %v626 = vsub.f32 %v503, %v579
      %v627 = vsub.f32 %v506, %v582
      %v628 = vsub.f32 %v509, %v585
      %v629 = vsub.f32 %v512, %v588
      %v630 = vsub.f32 %v515, %v591
      %v631 = vsub.f32 %v518, %v594
      %v632 = vsub.f32 %v521, %v597
      %v633 = vsub.f32 %v524, %v600
      %v634 = vsub.f32 %v527, %v603
      %v635 = vsub.f32 %v530, %v606
      %v636 = vsub.f32 %v533, %v609
      %v637 = vsub.f32 %v536, %v612
      %v638 = vsub.f32 %v539, %v615
      %v639 = vsub.f32 %v542, %v618
      %v640 = vsub.f32 %v545, %v621
      %v641 = vmax.f32 %v567, 1e-24
      %v642 = vmax.f32 %v570, 1e-24
      %v643 = vmax.f32 %v573, 1e-24
      %v644 = vmax.f32 %v576, 1e-24
      %v645 = vmax.f32 %v579, 1e-24
      %v646 = vmax.f32 %v582, 1e-24
      %v647 = vmax.f32 %v585, 1e-24
      %v648 = vmax.f32 %v588, 1e-24
      %v649 = vmax.f32 %v591, 1e-24
      %v650 = vmax.f32 %v594, 1e-24
      %v651 = vmax.f32 %v597, 1e-24
      %v652 = vmax.f32 %v600, 1e-24
      %v653 = vmax.f32 %v603, 1e-24
      %v654 = vmax.f32 %v606, 1e-24
      %v655 = vmax.f32 %v609, 1e-24
      %v656 = vmax.f32 %v612, 1e-24
      %v657 = vmax.f32 %v615, 1e-24
      %v658 = vmax.f32 %v618, 1e-24
      %v659 = vmax.f32 %v621, 1e-24
      %v660 = vrsqrt.pop %v641
      %v661 = vrsqrt.pop %v642
      %v662 = vrsqrt.pop %v643
      %v663 = vrsqrt.pop %v644
      %v664 = vrsqrt.pop %v645
      %v665 = vrsqrt.pop %v646
      %v666 = vrsqrt.pop %v647
      %v667 = vrsqrt.pop %v648
      %v668 = vrsqrt.pop %v649
      %v669 = vrsqrt.pop %v650
      %v670 = vrsqrt.pop %v651
      %v671 = vrsqrt.pop %v652
      %v672 = vrsqrt.pop %v653
      %v673 = vrsqrt.pop %v654
      %v674 = vrsqrt.pop %v655
      %v675 = vrsqrt.pop %v656
      %v676 = vrsqrt.pop %v657
      %v677 = vrsqrt.pop %v658
      %v678 = vrsqrt.pop %v659
      %v679 = vmax.f32 %v622, 1e-24
      %v680 = vmax.f32 %v623, 1e-24
      %v681 = vmax.f32 %v624, 1e-24
      %v682 = vmax.f32 %v625, 1e-24
      %v683 = vmax.f32 %v626, 1e-24
      %v684 = vmax.f32 %v627, 1e-24
      %v685 = vmax.f32 %v628, 1e-24
      %v686 = vmax.f32 %v629, 1e-24
      %v687 = vmax.f32 %v630, 1e-24
      %v688 = vmax.f32 %v631, 1e-24
      %v689 = vmax.f32 %v632, 1e-24
      %v690 = vmax.f32 %v633, 1e-24
      %v691 = vmax.f32 %v634, 1e-24
      %v692 = vmax.f32 %v635, 1e-24
      %v693 = vmax.f32 %v636, 1e-24
      %v694 = vmax.f32 %v637, 1e-24
      %v695 = vmax.f32 %v638, 1e-24
      %v696 = vmax.f32 %v639, 1e-24
      %v697 = vmax.f32 %v640, 1e-24
      %v698 = vrsqrt.pop %v679
      %v699 = vrsqrt.pop %v680
      %v700 = vrsqrt.pop %v681
      %v701 = vrsqrt.pop %v682
      %v702 = vrsqrt.pop %v683
      %v703 = vrsqrt.pop %v684
      %v704 = vrsqrt.pop %v685
      %v705 = vrsqrt.pop %v686
      %v706 = vrsqrt.pop %v687
      %v707 = vrsqrt.pop %v688
      %v708 = vrsqrt.pop %v689
      %v709 = vrsqrt.pop %v690
      %v710 = vrsqrt.pop %v691
      %v711 = vrsqrt.pop %v692
      %v712 = vrsqrt.pop %v693
      %v713 = vrsqrt.pop %v694
      %v714 = vrsqrt.pop %v695
      %v715 = vrsqrt.pop %v696
      %v716 = vrsqrt.pop %v697
      %v717 = vsel %vm469, %v660, %v698
      %v718 = vsel %vm469, %v661, %v699
      %v719 = vsel %vm469, %v662, %v700
      %v720 = vsel %vm469, %v663, %v701
      %v721 = vsel %vm469, %v664, %v702
      %v722 = vsel %vm469, %v665, %v703
      %v723 = vsel %vm469, %v666, %v704
      %v724 = vsel %vm469, %v667, %v705
      %v725 = vsel %vm469, %v668, %v706
      %v726 = vsel %vm469, %v669, %v707
      %v727 = vsel %vm469, %v670, %v708
      %v728 = vsel %vm469, %v671, %v709
      %v729 = vsel %vm469, %v672, %v710
      %v730 = vsel %vm469, %v673, %v711
      %v731 = vsel %vm469, %v674, %v712
      %v732 = vsel %vm469, %v675, %v713
      %v733 = vsel %vm469, %v676, %v714
      %v734 = vsel %vm469, %v677, %v715
      %v735 = vsel %vm469, %v678, %v716
      %v736 = vmul.f32 %v374, %v717
      %v737 = vmul.f32 %v379, %v718
      %v738 = vmul.f32 %v384, %v719
      %v739 = vmul.f32 %v389, %v720
      %v740 = vmul.f32 %v394, %v721
      %v741 = vmul.f32 %v399, %v722
      %v742 = vmul.f32 %v404, %v723
      %v743 = vmul.f32 %v409, %v724
      %v744 = vmul.f32 %v414, %v725
      %v745 = vmul.f32 %v419, %v726
      %v746 = vmul.f32 %v424, %v727
      %v747 = vmul.f32 %v429, %v728
      %v748 = vmul.f32 %v434, %v729
      %v749 = vmul.f32 %v439, %v730
      %v750 = vmul.f32 %v444, %v731
      %v751 = vmul.f32 %v449, %v732
      %v752 = vmul.f32 %v454, %v733
      %v753 = vmul.f32 %v459, %v734
      %v754 = vmul.f32 %v464, %v735
      %vm755 = vcmask 261120
      %756 = vst.msk [vmem:[%s207] sm:$0xff] %vm755, %v736
      %757 = vst.msk [vmem:[%s207 + $0x8] sm:$0xff] %vm755, %v737
      %758 = vst.msk [vmem:[%s207 + $0x10] sm:$0xff] %vm755, %v738
      %759 = vst.msk [vmem:[%s207 + $0x18] sm:$0xff] %vm755, %v739
      %760 = vst.msk [vmem:[%s207 + $0x20] sm:$0xff] %vm755, %v740
      %761 = vst.msk [vmem:[%s207 + $0x28] sm:$0xff] %vm755, %v741
      %762 = vst.msk [vmem:[%s207 + $0x30] sm:$0xff] %vm755, %v742
      %763 = vst.msk [vmem:[%s207 + $0x38] sm:$0xff] %vm755, %v743
      %764 = vst.msk [vmem:[%s207 + $0x40] sm:$0xff] %vm755, %v744
      %765 = vst.msk [vmem:[%s207 + $0x48] sm:$0xff] %vm755, %v745
      %766 = vst.msk [vmem:[%s207 + $0x50] sm:$0xff] %vm755, %v746
      %767 = vst.msk [vmem:[%s207 + $0x58] sm:$0xff] %vm755, %v747
      %768 = vst.msk [vmem:[%s207 + $0x60] sm:$0xff] %vm755, %v748
      %769 = vst.msk [vmem:[%s207 + $0x68] sm:$0xff] %vm755, %v749
      %770 = vst.msk [vmem:[%s207 + $0x70] sm:$0xff] %vm755, %v750
      %771 = vst.msk [vmem:[%s207 + $0x78] sm:$0xff] %vm755, %v751
      %772 = vst.msk [vmem:[%s207 + $0x80] sm:$0xff] %vm755, %v752
      %773 = vst.msk [vmem:[%s207 + $0x88] sm:$0xff] %vm755, %v753
      %774 = vst.msk [vmem:[%s207 + $0x90] sm:$0xff] %vm755, %v754
      %794 = vrot.lane.b32.xlu0 %v736, 96
      %v795 = vpop.permute.xlu0 %794
      %796 = vrot.lane.b32.xlu0 %v737, 96
      %v797 = vpop.permute.xlu0 %796
      %798 = vrot.lane.b32.xlu0 %v738, 96
      %v799 = vpop.permute.xlu0 %798
      %800 = vrot.lane.b32.xlu0 %v739, 96
      %v801 = vpop.permute.xlu0 %800
      %802 = vrot.lane.b32.xlu0 %v740, 96
      %v803 = vpop.permute.xlu0 %802
      %804 = vrot.lane.b32.xlu0 %v741, 96
      %v805 = vpop.permute.xlu0 %804
      %806 = vrot.lane.b32.xlu0 %v742, 96
      %v807 = vpop.permute.xlu0 %806
      %808 = vrot.lane.b32.xlu0 %v743, 96
      %v809 = vpop.permute.xlu0 %808
      %810 = vrot.lane.b32.xlu0 %v744, 96
      %v811 = vpop.permute.xlu0 %810
      %812 = vrot.lane.b32.xlu0 %v745, 96
      %v813 = vpop.permute.xlu0 %812
      %814 = vrot.lane.b32.xlu0 %v746, 96
      %v815 = vpop.permute.xlu0 %814
      %816 = vrot.lane.b32.xlu0 %v747, 96
      %v817 = vpop.permute.xlu0 %816
      %818 = vrot.lane.b32.xlu0 %v748, 96
      %v819 = vpop.permute.xlu0 %818
      %820 = vrot.lane.b32.xlu0 %v749, 96
      %v821 = vpop.permute.xlu0 %820
      %822 = vrot.lane.b32.xlu0 %v750, 96
      %v823 = vpop.permute.xlu0 %822
      %824 = vrot.lane.b32.xlu0 %v751, 96
      %v825 = vpop.permute.xlu0 %824
      %826 = vrot.lane.b32.xlu0 %v752, 96
      %v827 = vpop.permute.xlu0 %826
      %828 = vrot.lane.b32.xlu0 %v753, 96
      %v829 = vpop.permute.xlu0 %828
      %830 = vrot.lane.b32.xlu0 %v754, 96
      %v831 = vpop.permute.xlu0 %830
      %851 = vst.msk [vmem:[%s213] sm:$0xff] %vm755, %v795
      %852 = vst.msk [vmem:[%s213 + $0x8] sm:$0xff] %vm755, %v797
      %853 = vst.msk [vmem:[%s213 + $0x10] sm:$0xff] %vm755, %v799
      %854 = vst.msk [vmem:[%s213 + $0x18] sm:$0xff] %vm755, %v801
      %855 = vst.msk [vmem:[%s213 + $0x20] sm:$0xff] %vm755, %v803
      %856 = vst.msk [vmem:[%s213 + $0x28] sm:$0xff] %vm755, %v805
      %857 = vst.msk [vmem:[%s213 + $0x30] sm:$0xff] %vm755, %v807
      %858 = vst.msk [vmem:[%s213 + $0x38] sm:$0xff] %vm755, %v809
      %859 = vst.msk [vmem:[%s213 + $0x40] sm:$0xff] %vm755, %v811
      %860 = vst.msk [vmem:[%s213 + $0x48] sm:$0xff] %vm755, %v813
      %861 = vst.msk [vmem:[%s213 + $0x50] sm:$0xff] %vm755, %v815
      %862 = vst.msk [vmem:[%s213 + $0x58] sm:$0xff] %vm755, %v817
      %863 = vst.msk [vmem:[%s213 + $0x60] sm:$0xff] %vm755, %v819
      %864 = vst.msk [vmem:[%s213 + $0x68] sm:$0xff] %vm755, %v821
      %865 = vst.msk [vmem:[%s213 + $0x70] sm:$0xff] %vm755, %v823
      %866 = vst.msk [vmem:[%s213 + $0x78] sm:$0xff] %vm755, %v825
      %867 = vst.msk [vmem:[%s213 + $0x80] sm:$0xff] %vm755, %v827
      %868 = vst.msk [vmem:[%s213 + $0x88] sm:$0xff] %vm755, %v829
      %869 = vst.msk [vmem:[%s213 + $0x90] sm:$0xff] %vm755, %v831
      %s870 = smul.u32 19, %s16
      %p871 = scmp.lt.s32.totalorder %s870, 37
      %s872 = scalar_select %p871, %s870, 37
      %s873 = smul.addr %s872, 8
      %s874 = scalar_lea.vmem %s3, %s873
      %s875 = smul.u32 19, %s16
      %p876 = scmp.lt.s32.totalorder %s875, 37
      %s877 = scalar_select %p876, %s875, 37
      %s878 = smul.addr %s877, 8
      %s879 = scalar_lea.vmem %s4, %s878
      // Predicated region
      $region33: #{tpu_custom_call.1} parent=31 // pred_check
        %p880 = pneg %p102
      $region34: #{tpu_custom_call.1} parent=31 // pred_check_branch
        %882 = sbr.rel (%p880) target = $region36
      $region35: #{tpu_custom_call.1} parent=31 // pred_region
        %s883 = smul.u32 19, %s16
      $region36: #{tpu_custom_call.1} parent=31 // pred_fallthru
        _
      // Predicated region
      $region37: #{tpu_custom_call.1} parent=31 // pred_check
        %p884 = pneg %p128
      $region38: #{tpu_custom_call.1} parent=31 // pred_check_branch
        %886 = sbr.rel (%p884) target = $region40
      $region39: #{tpu_custom_call.1} parent=31 // pred_region
        %s887 = smul.u32 19, %s16
      $region40: #{tpu_custom_call.1} parent=31 // pred_fallthru
        _
    $region32: #{tpu_custom_call.1} parent=5 // pred_fallthru
      _
    %p888 = scmp.le.s32.totalorder 2, %s11
    // Predicated region
    $region41: #{tpu_custom_call.1} parent=5 // pred_check
      %p889 = pneg %p888
    $region42: #{tpu_custom_call.1} parent=5 // pred_check_branch
      %891 = sbr.rel (%p889) target = $region44
    $region43: #{tpu_custom_call.1} parent=5 // pred_region
      %s892 = ssub.s32 %s11, 2
      // Predicated region
      $region45: #{tpu_custom_call.1} parent=43 // pred_check
        %p893 = pneg %p108
      $region46: #{tpu_custom_call.1} parent=43 // pred_check_branch
        %895 = sbr.rel (%p893) target = $region48
      $region47: #{tpu_custom_call.1} parent=43 // pred_region
        %s896 = smul.u32 19, %s17
        %p897 = scmp.lt.s32.totalorder %s896, 37
        %s898 = scalar_select %p897, %s896, 37
        %s899 = smul.addr %s898, 8
        %s900 = scalar_lea.vmem %s3, %s899
      $region48: #{tpu_custom_call.1} parent=43 // pred_fallthru
        _
      // Predicated region
      $region49: #{tpu_custom_call.1} parent=43 // pred_check
        %p901 = pneg %p134
      $region50: #{tpu_custom_call.1} parent=43 // pred_check_branch
        %903 = sbr.rel (%p901) target = $region52
      $region51: #{tpu_custom_call.1} parent=43 // pred_region
        %s904 = smul.u32 19, %s17
        %p905 = scmp.lt.s32.totalorder %s904, 37
        %s906 = scalar_select %p905, %s904, 37
        %s907 = smul.addr %s906, 8
        %s908 = scalar_lea.vmem %s4, %s907
      $region52: #{tpu_custom_call.1} parent=43 // pred_fallthru
        _
    $region44: #{tpu_custom_call.1} parent=5 // pred_fallthru
      _
  $region6: #{tpu_custom_call.1} parent=0 // loop_footer
    %s15 = sadd.s32 1, %s11
  $region7: #{tpu_custom_call.1} parent=0 // loop_footer_branch
    %10 = sbr.rel target = $region3
  $region8: #{tpu_custom_call.1} parent=0 // loop_exit
    _

// kernel: tpu_custom_call.1
$region0: #{tpu_custom_call.1}
  #allocation0 [shape = 'u32[]', space=smem, size = 0x4, offset = 0x4, fixed_abs, tag = 'smem constant byte address 0x4 - core index']
  #allocation1 [shape = 'u32[144,128]{1,0:T(1,128)}', space=vmem, size = 0x12000, scoped, tag = 'internal scratch']
  %s0 = inlined_call_operand.vmem [shape: f32[304,64], index: 0, kind: input, shape index: {}]
  %s1 = inlined_call_operand.vmem [shape: f32[64,64], index: 1, kind: input, shape index: {}]
  %s2 = inlined_call_operand.vmem [shape: f32[1,64], index: 2, kind: input, shape index: {}]
  %s3 = inlined_call_operand.vmem [shape: f32[304,32], index: 3, kind: output, shape index: {0}]
  %s4 = inlined_call_operand.vmem [shape: f32[304,32], index: 4, kind: output, shape index: {1}]
  %5 = xla_tuple %s3, %s4
  %s6 = sld [smem:[#allocation0]]
  $region53: #{tpu_custom_call.1} parent=0
    _
  %s8 = ssub.s32 1, %s6
  %s9 = scalar_select 0, %s8, %s6
  loop: start=0, step=1, limit=4
  $region2: #{tpu_custom_call.1} parent=0 // loop_pre_header
    _
  $region3: #{tpu_custom_call.1} parent=0 // loop_header
    %s11 = sphi 0, %s15
    %p12 = scmp.ge.s32.totalorder %s11, 4
    %s21 = sphi 0, %s23
    %s24 = sphi 0, %s21
    %s25 = sphi 0, %s24
    %s41 = sphi 0, %s25
    %s45 = sphi 0, %s45
    %s47 = sphi 0, %s45
    %s48 = sphi 0, %s47
    %s62 = sphi 0, %s48
    %s66 = sphi 0, %s66
    %s68 = sphi 0, %s66
    %s69 = sphi 0, %s68
    %s83 = sphi 0, %s69
    %s89 = sphi 0, %s91
    %s92 = sphi 0, %s89
    %s93 = sphi 0, %s92
    %s109 = sphi 0, %s93
    %s115 = sphi 0, %s117
    %s118 = sphi 0, %s115
    %s119 = sphi 0, %s118
    %s135 = sphi 0, %s119
  $region4: #{tpu_custom_call.1} parent=0 // loop_header_branch
    %14 = sbr.rel (%p12) target = $region8
  $region5: #{tpu_custom_call.1} parent=0 // loop_body
    %s16 = ssub.s32 %s11, 1
    %s17 = ssub.s32 %s11, 2
    %s18 = sadd.s32 %s11, 1
    %s19 = ssub.s32 %s11, %s18
    %p20 = scmp.eq.s32.totalorder %s19, 0
    %s22 = sadd.s32 %s21, 1
    %s23 = scalar_select %p20, %s21, %s22
    %p26 = pneg %p20
    %p27 = scmp.eq.s32.totalorder %s11, 1
    %p28 = por %p26, %p27
    %p29 = scmp.ne.s32.totalorder %s21, %s24
    %p30 = scmp.eq.s32.totalorder %s11, 0
    %p31 = por %p29, %p30
    %p32 = scmp.ne.s32.totalorder %s21, %s24
    %p33 = scmp.eq.s32.totalorder %s16, 1
    %p34 = por %p32, %p33
    %p35 = scmp.ne.s32.totalorder %s24, %s25
    %p36 = scmp.eq.s32.totalorder %s16, 0
    %p37 = por %p35, %p36
    %p38 = scmp.ne.s32.totalorder %s24, %s25
    %p39 = scmp.eq.s32.totalorder %s17, 1
    %p40 = por %p38, %p39
    %p42 = scmp.ne.s32.totalorder %s25, %s41
    %p43 = scmp.eq.s32.totalorder %s17, 0
    %p44 = por %p42, %p43
    %s46 = sadd.s32 %s45, 1
    %p49 = scmp.eq.s32.totalorder %s11, 1
    %p50 = scmp.ne.s32.totalorder %s45, %s47
    %p51 = scmp.eq.s32.totalorder %s11, 0
    %p52 = por %p50, %p51
    %p53 = scmp.ne.s32.totalorder %s45, %s47
    %p54 = scmp.eq.s32.totalorder %s16, 1
    %p55 = por %p53, %p54
    %p56 = scmp.ne.s32.totalorder %s47, %s48
    %p57 = scmp.eq.s32.totalorder %s16, 0
    %p58 = por %p56, %p57
    %p59 = scmp.ne.s32.totalorder %s47, %s48
    %p60 = scmp.eq.s32.totalorder %s17, 1
    %p61 = por %p59, %p60
    %p63 = scmp.ne.s32.totalorder %s48, %s62
    %p64 = scmp.eq.s32.totalorder %s17, 0
    %p65 = por %p63, %p64
    %s67 = sadd.s32 %s66, 1
    %p70 = scmp.eq.s32.totalorder %s11, 1
    %p71 = scmp.ne.s32.totalorder %s66, %s68
    %p72 = scmp.eq.s32.totalorder %s11, 0
    %p73 = por %p71, %p72
    %p74 = scmp.ne.s32.totalorder %s66, %s68
    %p75 = scmp.eq.s32.totalorder %s16, 1
    %p76 = por %p74, %p75
    %p77 = scmp.ne.s32.totalorder %s68, %s69
    %p78 = scmp.eq.s32.totalorder %s16, 0
    %p79 = por %p77, %p78
    %p80 = scmp.ne.s32.totalorder %s68, %s69
    %p81 = scmp.eq.s32.totalorder %s17, 1
    %p82 = por %p80, %p81
    %p84 = scmp.ne.s32.totalorder %s69, %s83
    %p85 = scmp.eq.s32.totalorder %s17, 0
    %p86 = por %p84, %p85
    %s87 = ssub.s32 %s11, %s18
    %p88 = scmp.eq.s32.totalorder %s87, 0
    %s90 = sadd.s32 %s89, 1
    %s91 = scalar_select %p88, %s89, %s90
    %p94 = pneg %p88
    %p95 = scmp.eq.s32.totalorder %s11, 1
    %p96 = por %p94, %p95
    %p97 = scmp.ne.s32.totalorder %s89, %s92
    %p98 = scmp.eq.s32.totalorder %s11, 0
    %p99 = por %p97, %p98
    %p100 = scmp.ne.s32.totalorder %s89, %s92
    %p101 = scmp.eq.s32.totalorder %s16, 1
    %p102 = por %p100, %p101
    %p103 = scmp.ne.s32.totalorder %s92, %s93
    %p104 = scmp.eq.s32.totalorder %s16, 0
    %p105 = por %p103, %p104
    %p106 = scmp.ne.s32.totalorder %s92, %s93
    %p107 = scmp.eq.s32.totalorder %s17, 1
    %p108 = por %p106, %p107
    %p110 = scmp.ne.s32.totalorder %s93, %s109
    %p111 = scmp.eq.s32.totalorder %s17, 0
    %p112 = por %p110, %p111
    %s113 = ssub.s32 %s11, %s18
    %p114 = scmp.eq.s32.totalorder %s113, 0
    %s116 = sadd.s32 %s115, 1
    %s117 = scalar_select %p114, %s115, %s116
    %p120 = pneg %p114
    %p121 = scmp.eq.s32.totalorder %s11, 1
    %p122 = por %p120, %p121
    %p123 = scmp.ne.s32.totalorder %s115, %s118
    %p124 = scmp.eq.s32.totalorder %s11, 0
    %p125 = por %p123, %p124
    %p126 = scmp.ne.s32.totalorder %s115, %s118
    %p127 = scmp.eq.s32.totalorder %s16, 1
    %p128 = por %p126, %p127
    %p129 = scmp.ne.s32.totalorder %s118, %s119
    %p130 = scmp.eq.s32.totalorder %s16, 0
    %p131 = por %p129, %p130
    %p132 = scmp.ne.s32.totalorder %s118, %s119
    %p133 = scmp.eq.s32.totalorder %s17, 1
    %p134 = por %p132, %p133
    %p136 = scmp.ne.s32.totalorder %s119, %s135
    %p137 = scmp.eq.s32.totalorder %s17, 0
    %p138 = por %p136, %p137
    %p139 = scmp.le.s32.totalorder 1, %s11
    %p140 = scmp.lt.s32.totalorder %s11, 3
    %p141 = pnand %p139, %p140
    %p142 = pneg %p141
    // Predicated region
    $region9: #{tpu_custom_call.1} parent=5 // pred_check
      _
    $region10: #{tpu_custom_call.1} parent=5 // pred_check_branch
      %144 = sbr.rel (%p141) target = $region12
    $region11: #{tpu_custom_call.1} parent=5 // pred_region
      %s145 = ssub.s32 %s11, 1
      // Predicated region
      $region13: #{tpu_custom_call.1} parent=11 // pred_check
        %p146 = pneg %p58
      $region14: #{tpu_custom_call.1} parent=11 // pred_check_branch
        %148 = sbr.rel (%p146) target = $region16
      $region15: #{tpu_custom_call.1} parent=11 // pred_region
        _
      $region16: #{tpu_custom_call.1} parent=11 // pred_fallthru
        _
      // Predicated region
      $region17: #{tpu_custom_call.1} parent=11 // pred_check
        %p149 = pneg %p79
      $region18: #{tpu_custom_call.1} parent=11 // pred_check_branch
        %151 = sbr.rel (%p149) target = $region20
      $region19: #{tpu_custom_call.1} parent=11 // pred_region
        _
      $region20: #{tpu_custom_call.1} parent=11 // pred_fallthru
        _
    $region12: #{tpu_custom_call.1} parent=5 // pred_fallthru
      _
    %p152 = scmp.lt.s32.totalorder %s11, 2
    // Predicated region
    $region21: #{tpu_custom_call.1} parent=5 // pred_check
      %p153 = pneg %p152
    $region22: #{tpu_custom_call.1} parent=5 // pred_check_branch
      %155 = sbr.rel (%p153) target = $region24
    $region23: #{tpu_custom_call.1} parent=5 // pred_region
      // Predicated region
      $region25: #{tpu_custom_call.1} parent=23 // pred_check
        %p156 = pneg %p31
      $region26: #{tpu_custom_call.1} parent=23 // pred_check_branch
        %158 = sbr.rel (%p156) target = $region28
      $region27: #{tpu_custom_call.1} parent=23 // pred_region
        %s159 = smul.u32 19, %s11
        %p160 = scmp.lt.s32.totalorder %s159, 37
        %s161 = scalar_select %p160, %s159, 37
        %s162 = smul.addr %s161, 8
        %s163 = scalar_lea.vmem %s0, %s162
        %s164 = smul.u32 19, %s11
      $region28: #{tpu_custom_call.1} parent=23 // pred_fallthru
        _
    $region24: #{tpu_custom_call.1} parent=5 // pred_fallthru
      _
    %p165 = scmp.le.s32.totalorder 1, %s11
    %p166 = scmp.lt.s32.totalorder %s11, 3
    %p167 = pnand %p165, %p166
    %p168 = pneg %p167
    // Predicated region
    $region29: #{tpu_custom_call.1} parent=5 // pred_check
      _
    $region30: #{tpu_custom_call.1} parent=5 // pred_check_branch
      %170 = sbr.rel (%p167) target = $region32
    $region31: #{tpu_custom_call.1} parent=5 // pred_region
      %s171 = ssub.s32 %s11, 1
      %s172 = smul.u32 19, %s16
      %p173 = scmp.lt.s32.totalorder %s172, 37
      %s174 = scalar_select %p173, %s172, 37
      %s175 = smul.addr %s174, 8
      %s176 = scalar_lea.vmem %s0, %s175
      %p177 = pneg %p37
      %p178 = pneg %p34
      %p179 = pneg %p58
      %p180 = pneg %p55
      %p181 = pneg %p79
      %p182 = pneg %p76
      %p183 = pneg %p105
      %p184 = pneg %p102
      %s185 = smul.u32 19, %s16
      %p186 = scmp.lt.s32.totalorder %s185, 37
      %s187 = scalar_select %p186, %s185, 37
      %s188 = smul.addr %s187, 8
      %s189 = scalar_lea.vmem %s3, %s188
      %p190 = pneg %p131
      %p191 = pneg %p128
      %s192 = smul.u32 19, %s16
      %p193 = scmp.lt.s32.totalorder %s192, 37
      %s194 = scalar_select %p193, %s192, 37
      %s195 = smul.addr %s194, 8
      %s196 = scalar_lea.vmem %s4, %s195
      %s197 = smul.u32 19, %s16
      %p198 = scmp.lt.s32.totalorder %s197, 37
      %s199 = scalar_select %p198, %s197, 37
      %s200 = smul.addr %s199, 8
      %s201 = scalar_lea.vmem %s0, %s200
      %s202 = smul.u32 19, %s16
      %s203 = smul.u32 19, %s16
      %p204 = scmp.lt.s32.totalorder %s203, 37
      %s205 = scalar_select %p204, %s203, 37
      %s206 = smul.addr %s205, 8
      %s207 = scalar_lea.vmem %s3, %s206
      %s208 = smul.u32 19, %s16
      %s209 = smul.u32 19, %s16
      %p210 = scmp.lt.s32.totalorder %s209, 37
      %s211 = scalar_select %p210, %s209, 37
      %s212 = smul.addr %s211, 8
      %s213 = scalar_lea.vmem %s4, %s212
      %s214 = smul.u32 19, %s16
      %v215 = vld [vmem:[%s201] sm:$0xff]
      %v216 = vld [vmem:[%s201 + $0x8] sm:$0xff]
      %v217 = vld [vmem:[%s201 + $0x10] sm:$0xff]
      %v218 = vld [vmem:[%s201 + $0x18] sm:$0xff]
      %v219 = vld [vmem:[%s201 + $0x20] sm:$0xff]
      %v220 = vld [vmem:[%s201 + $0x28] sm:$0xff]
      %v221 = vld [vmem:[%s201 + $0x30] sm:$0xff]
      %v222 = vld [vmem:[%s201 + $0x38] sm:$0xff]
      %v223 = vld [vmem:[%s201 + $0x40] sm:$0xff]
      %v224 = vld [vmem:[%s201 + $0x48] sm:$0xff]
      %v225 = vld [vmem:[%s201 + $0x50] sm:$0xff]
      %v226 = vld [vmem:[%s201 + $0x58] sm:$0xff]
      %v227 = vld [vmem:[%s201 + $0x60] sm:$0xff]
      %v228 = vld [vmem:[%s201 + $0x68] sm:$0xff]
      %v229 = vld [vmem:[%s201 + $0x70] sm:$0xff]
      %v230 = vld [vmem:[%s201 + $0x78] sm:$0xff]
      %v231 = vld [vmem:[%s201 + $0x80] sm:$0xff]
      %v232 = vld [vmem:[%s201 + $0x88] sm:$0xff]
      %v233 = vld [vmem:[%s201 + $0x90] sm:$0xff]
      %v234 = vld [vmem:[%s1] sm:$0xff]
      %v235 = vld [vmem:[%s1 + $0x8] sm:$0xff]
      %v236 = vld [vmem:[%s1 + $0x10] sm:$0xff]
      %v237 = vld [vmem:[%s1 + $0x18] sm:$0xff]
      %v238 = vld [vmem:[%s1 + $0x20] sm:$0xff]
      %v239 = vld [vmem:[%s1 + $0x28] sm:$0xff]
      %v240 = vld [vmem:[%s1 + $0x30] sm:$0xff]
      %v241 = vld [vmem:[%s1 + $0x38] sm:$0xff]
      %v242 = vld [vmem:[%s2] sm:$0x1]
      %v244 = vlaneseq
      %v245 = vshrl.u32 %v244, 7
      %v246 = vsub.s32 0, %v245
      %v247 = vrot.slane %v242, %v246
      %vm249 = vcmask 523264
      %v251 = vsel %vm249, %v215, 0
      %v254 = vsel %vm249, %v216, 0
      %v257 = vsel %vm249, %v217, 0
      %v260 = vsel %vm249, %v218, 0
      %v263 = vsel %vm249, %v219, 0
      %v266 = vsel %vm249, %v220, 0
      %v269 = vsel %vm249, %v221, 0
      %v272 = vsel %vm249, %v222, 0
      %v275 = vsel %vm249, %v223, 0
      %v278 = vsel %vm249, %v224, 0
      %v281 = vsel %vm249, %v225, 0
      %v284 = vsel %vm249, %v226, 0
      %v287 = vsel %vm249, %v227, 0
      %v290 = vsel %vm249, %v228, 0
      %v293 = vsel %vm249, %v229, 0
      %v296 = vsel %vm249, %v230, 0
      %v299 = vsel %vm249, %v231, 0
      %v302 = vsel %vm249, %v232, 0
      %v305 = vsel %vm249, %v233, 0
      %307 = vmatprep.subr.mxu0 0.0
      %308 = vmatpush1.msra.mxu0 %v234
      %309 = vmatprep.subr.mxu0 0.0
      %310 = vmatpush1.msra.mxu0 %v235
      %311 = vmatprep.subr.mxu0 0.0
      %312 = vmatpush1.msra.mxu0 %v236
      %313 = vmatprep.subr.mxu0 0.0
      %314 = vmatpush1.msra.mxu0 %v237
      %315 = vmatprep.subr.mxu0 0.0
      %316 = vmatpush1.msra.mxu0 %v238
      %317 = vmatprep.subr.mxu0 0.0
      %318 = vmatpush1.msra.mxu0 %v239
      %319 = vmatprep.subr.mxu0 0.0
      %320 = vmatpush1.msra.mxu0 %v240
      %321 = vmatprep.subr.mxu0 0.0
      %322 = vmatpush1.msra.mxu0 %v241
      %323 = vmatprep.subr.mxu0 0.0
      %324 = vmatpush1.msra.mxu0 0.0
      %325 = vmatprep.subr.mxu0 0.0
      %326 = vmatpush1.msra.mxu0 0.0
      %327 = vmatprep.subr.mxu0 0.0
      %328 = vmatpush1.msra.mxu0 0.0
      %329 = vmatprep.subr.mxu0 0.0
      %330 = vmatpush1.msra.mxu0 0.0
      %331 = vmatprep.subr.mxu0 0.0
      %332 = vmatpush1.msra.mxu0 0.0
      %333 = vmatprep.subr.mxu0 0.0
      %334 = vmatpush1.msra.mxu0 0.0
      %335 = vmatprep.subr.mxu0 0.0
      %336 = vmatpush1.msra.mxu0 0.0
      %337 = vmatprep.subr.mxu0 0.0
      %338 = vmatpush1.msra.mxu0 0.0
      %339 = vmatprep.subr.mxu0 0.0
      %340 = vmatpush1.msra.mxu0 0.0
      %341 = vmatprep.subr.mxu0 0.0
      %342 = vmatpush1.msra.mxu0 0.0
      %343 = vmatprep.subr.mxu0 0.0
      %344 = vmatpush1.msra.mxu0 0.0
      %345 = vmatprep.subr.mxu0 0.0
      %346 = vmatpush1.msra.mxu0 0.0
      %347 = vmatprep.subr.mxu0 0.0
      %348 = vmatpush1.msra.mxu0 0.0
      %349 = vmatprep.subr.mxu0 0.0
      %350 = vmatpush1.msra.mxu0 0.0
      %351 = vmatprep.subr.mxu0 0.0
      %352 = vmatpush1.msra.mxu0 0.0
      %353 = vmatprep.subr.mxu0 0.0
      %354 = vmatpush1.msra.mxu0 0.0
      %355 = vmatprep.subr.mxu0 0.0
      %356 = vmatpush1.msra.mxu0 0.0
      %357 = vmatprep.subr.mxu0 0.0
      %358 = vmatpush1.msra.mxu0 0.0
      %359 = vmatprep.subr.mxu0 0.0
      %360 = vmatpush1.msra.mxu0 0.0
      %361 = vmatprep.subr.mxu0 0.0
      %362 = vmatpush1.msra.mxu0 0.0
      %363 = vmatprep.subr.mxu0 0.0
      %364 = vmatpush1.msra.mxu0 0.0
      %365 = vmatprep.subr.mxu0 0.0
      %366 = vmatpush1.msra.mxu0 0.0
      %367 = vmatprep.subr.mxu0 0.0
      %368 = vmatpush1.msra.mxu0 0.0
      %369 = vmatprep.subr.mxu0 0.0
      %370 = vmatpush1.msra.mxu0 0.0
      %371 = vmatprep.mubr.f32.mxu0 0.0
      %372 = vmatmul.mubr.f32.gmra.mrb[0].mxu0 %v251
      %v373 = vpop.f32.mrb[0].mxu0
      %v374 = vadd.f32 %v247, %v373
      %v375 = vpop.f32.mrb[0].mxu0
      %376 = vmatprep.mubr.f32.mxu0 0.0
      %377 = vmatmul.mubr.f32.gmra.mrb[0].mxu0 %v254
      %v378 = vpop.f32.mrb[0].mxu0
      %v379 = vadd.f32 %v247, %v378
      %v380 = vpop.f32.mrb[0].mxu0
      %381 = vmatprep.mubr.f32.mxu0 0.0
      %382 = vmatmul.mubr.f32.gmra.mrb[0].mxu0 %v257
      %v383 = vpop.f32.mrb[0].mxu0
      %v384 = vadd.f32 %v247, %v383
      %v385 = vpop.f32.mrb[0].mxu0
      %386 = vmatprep.mubr.f32.mxu0 0.0
      %387 = vmatmul.mubr.f32.gmra.mrb[0].mxu0 %v260
      %v388 = vpop.f32.mrb[0].mxu0
      %v389 = vadd.f32 %v247, %v388
      %v390 = vpop.f32.mrb[0].mxu0
      %391 = vmatprep.mubr.f32.mxu0 0.0
      %392 = vmatmul.mubr.f32.gmra.mrb[0].mxu0 %v263
      %v393 = vpop.f32.mrb[0].mxu0
      %v394 = vadd.f32 %v247, %v393
      %v395 = vpop.f32.mrb[0].mxu0
      %396 = vmatprep.mubr.f32.mxu0 0.0
      %397 = vmatmul.mubr.f32.gmra.mrb[0].mxu0 %v266
      %v398 = vpop.f32.mrb[0].mxu0
      %v399 = vadd.f32 %v247, %v398
      %v400 = vpop.f32.mrb[0].mxu0
      %401 = vmatprep.mubr.f32.mxu0 0.0
      %402 = vmatmul.mubr.f32.gmra.mrb[0].mxu0 %v269
      %v403 = vpop.f32.mrb[0].mxu0
      %v404 = vadd.f32 %v247, %v403
      %v405 = vpop.f32.mrb[0].mxu0
      %406 = vmatprep.mubr.f32.mxu0 0.0
      %407 = vmatmul.mubr.f32.gmra.mrb[0].mxu0 %v272
      %v408 = vpop.f32.mrb[0].mxu0
      %v409 = vadd.f32 %v247, %v408
      %v410 = vpop.f32.mrb[0].mxu0
      %411 = vmatprep.mubr.f32.mxu0 0.0
      %412 = vmatmul.mubr.f32.gmra.mrb[0].mxu0 %v275
      %v413 = vpop.f32.mrb[0].mxu0
      %v414 = vadd.f32 %v247, %v413
      %v415 = vpop.f32.mrb[0].mxu0
      %416 = vmatprep.mubr.f32.mxu0 0.0
      %417 = vmatmul.mubr.f32.gmra.mrb[0].mxu0 %v278
      %v418 = vpop.f32.mrb[0].mxu0
      %v419 = vadd.f32 %v247, %v418
      %v420 = vpop.f32.mrb[0].mxu0
      %421 = vmatprep.mubr.f32.mxu0 0.0
      %422 = vmatmul.mubr.f32.gmra.mrb[0].mxu0 %v281
      %v423 = vpop.f32.mrb[0].mxu0
      %v424 = vadd.f32 %v247, %v423
      %v425 = vpop.f32.mrb[0].mxu0
      %426 = vmatprep.mubr.f32.mxu0 0.0
      %427 = vmatmul.mubr.f32.gmra.mrb[0].mxu0 %v284
      %v428 = vpop.f32.mrb[0].mxu0
      %v429 = vadd.f32 %v247, %v428
      %v430 = vpop.f32.mrb[0].mxu0
      %431 = vmatprep.mubr.f32.mxu0 0.0
      %432 = vmatmul.mubr.f32.gmra.mrb[0].mxu0 %v287
      %v433 = vpop.f32.mrb[0].mxu0
      %v434 = vadd.f32 %v247, %v433
      %v435 = vpop.f32.mrb[0].mxu0
      %436 = vmatprep.mubr.f32.mxu0 0.0
      %437 = vmatmul.mubr.f32.gmra.mrb[0].mxu0 %v290
      %v438 = vpop.f32.mrb[0].mxu0
      %v439 = vadd.f32 %v247, %v438
      %v440 = vpop.f32.mrb[0].mxu0
      %441 = vmatprep.mubr.f32.mxu0 0.0
      %442 = vmatmul.mubr.f32.gmra.mrb[0].mxu0 %v293
      %v443 = vpop.f32.mrb[0].mxu0
      %v444 = vadd.f32 %v247, %v443
      %v445 = vpop.f32.mrb[0].mxu0
      %446 = vmatprep.mubr.f32.mxu0 0.0
      %447 = vmatmul.mubr.f32.gmra.mrb[0].mxu0 %v296
      %v448 = vpop.f32.mrb[0].mxu0
      %v449 = vadd.f32 %v247, %v448
      %v450 = vpop.f32.mrb[0].mxu0
      %451 = vmatprep.mubr.f32.mxu0 0.0
      %452 = vmatmul.mubr.f32.gmra.mrb[0].mxu0 %v299
      %v453 = vpop.f32.mrb[0].mxu0
      %v454 = vadd.f32 %v247, %v453
      %v455 = vpop.f32.mrb[0].mxu0
      %456 = vmatprep.mubr.f32.mxu0 0.0
      %457 = vmatmul.mubr.f32.gmra.mrb[0].mxu0 %v302
      %v458 = vpop.f32.mrb[0].mxu0
      %v459 = vadd.f32 %v247, %v458
      %v460 = vpop.f32.mrb[0].mxu0
      %461 = vmatprep.mubr.f32.mxu0 0.0
      %462 = vmatmul.mubr.f32.gmra.mrb[0].mxu0 %v305
      %v463 = vpop.f32.mrb[0].mxu0
      %v464 = vadd.f32 %v247, %v463
      %v465 = vpop.f32.mrb[0].mxu0
      %466 = vdwg.mxu0
      %v467 = vlaneseq
      %v468 = vand.u32 %v467, 127
      %vm469 = vcmp.lt.s32.totalorder %v468, 32
      %v470 = vmul.f32 %v374, %v374
      %v471 = vmul.f32 %v379, %v379
      %v472 = vmul.f32 %v384, %v384
      %v473 = vmul.f32 %v389, %v389
      %v474 = vmul.f32 %v394, %v394
      %v475 = vmul.f32 %v399, %v399
      %v476 = vmul.f32 %v404, %v404
      %v477 = vmul.f32 %v409, %v409
      %v478 = vmul.f32 %v414, %v414
      %v479 = vmul.f32 %v419, %v419
      %v480 = vmul.f32 %v424, %v424
      %v481 = vmul.f32 %v429, %v429
      %v482 = vmul.f32 %v434, %v434
      %v483 = vmul.f32 %v439, %v439
      %v484 = vmul.f32 %v444, %v444
      %v485 = vmul.f32 %v449, %v449
      %v486 = vmul.f32 %v454, %v454
      %v487 = vmul.f32 %v459, %v459
      %v488 = vmul.f32 %v464, %v464
      %v489 = vsel %vm249, %v470, 0.0
      %490 = vadd.xlane.f32.xlu0 %v489
      %v491 = vpop.xlane.xlu0 %490
      %v492 = vsel %vm249, %v471, 0.0
      %493 = vadd.xlane.f32.xlu0 %v492
      %v494 = vpop.xlane.xlu0 %493
      %v495 = vsel %vm249, %v472, 0.0
      %496 = vadd.xlane.f32.xlu0 %v495
      %v497 = vpop.xlane.xlu0 %496
      %v498 = vsel %vm249, %v473, 0.0
      %499 = vadd.xlane.f32.xlu0 %v498
      %v500 = vpop.xlane.xlu0 %499
      %v501 = vsel %vm249, %v474, 0.0
      %502 = vadd.xlane.f32.xlu0 %v501
      %v503 = vpop.xlane.xlu0 %502
      %v504 = vsel %vm249, %v475, 0.0
      %505 = vadd.xlane.f32.xlu0 %v504
      %v506 = vpop.xlane.xlu0 %505
      %v507 = vsel %vm249, %v476, 0.0
      %508 = vadd.xlane.f32.xlu0 %v507
      %v509 = vpop.xlane.xlu0 %508
      %v510 = vsel %vm249, %v477, 0.0
      %511 = vadd.xlane.f32.xlu0 %v510
      %v512 = vpop.xlane.xlu0 %511
      %v513 = vsel %vm249, %v478, 0.0
      %514 = vadd.xlane.f32.xlu0 %v513
      %v515 = vpop.xlane.xlu0 %514
      %v516 = vsel %vm249, %v479, 0.0
      %517 = vadd.xlane.f32.xlu0 %v516
      %v518 = vpop.xlane.xlu0 %517
      %v519 = vsel %vm249, %v480, 0.0
      %520 = vadd.xlane.f32.xlu0 %v519
      %v521 = vpop.xlane.xlu0 %520
      %v522 = vsel %vm249, %v481, 0.0
      %523 = vadd.xlane.f32.xlu0 %v522
      %v524 = vpop.xlane.xlu0 %523
      %v525 = vsel %vm249, %v482, 0.0
      %526 = vadd.xlane.f32.xlu0 %v525
      %v527 = vpop.xlane.xlu0 %526
      %v528 = vsel %vm249, %v483, 0.0
      %529 = vadd.xlane.f32.xlu0 %v528
      %v530 = vpop.xlane.xlu0 %529
      %v531 = vsel %vm249, %v484, 0.0
      %532 = vadd.xlane.f32.xlu0 %v531
      %v533 = vpop.xlane.xlu0 %532
      %v534 = vsel %vm249, %v485, 0.0
      %535 = vadd.xlane.f32.xlu0 %v534
      %v536 = vpop.xlane.xlu0 %535
      %v537 = vsel %vm249, %v486, 0.0
      %538 = vadd.xlane.f32.xlu0 %v537
      %v539 = vpop.xlane.xlu0 %538
      %v540 = vsel %vm249, %v487, 0.0
      %541 = vadd.xlane.f32.xlu0 %v540
      %v542 = vpop.xlane.xlu0 %541
      %v543 = vsel %vm249, %v488, 0.0
      %544 = vadd.xlane.f32.xlu0 %v543
      %v545 = vpop.xlane.xlu0 %544
      %v546 = vsel %vm469, %v470, 0.0
      %v547 = vsel %vm469, %v471, 0.0
      %v548 = vsel %vm469, %v472, 0.0
      %v549 = vsel %vm469, %v473, 0.0
      %v550 = vsel %vm469, %v474, 0.0
      %v551 = vsel %vm469, %v475, 0.0
      %v552 = vsel %vm469, %v476, 0.0
      %v553 = vsel %vm469, %v477, 0.0
      %v554 = vsel %vm469, %v478, 0.0
      %v555 = vsel %vm469, %v479, 0.0
      %v556 = vsel %vm469, %v480, 0.0
      %v557 = vsel %vm469, %v481, 0.0
      %v558 = vsel %vm469, %v482, 0.0
      %v559 = vsel %vm469, %v483, 0.0
      %v560 = vsel %vm469, %v484, 0.0
      %v561 = vsel %vm469, %v485, 0.0
      %v562 = vsel %vm469, %v486, 0.0
      %v563 = vsel %vm469, %v487, 0.0
      %v564 = vsel %vm469, %v488, 0.0
      %v565 = vsel %vm249, %v546, 0.0
      %566 = vadd.xlane.f32.xlu0 %v565
      %v567 = vpop.xlane.xlu0 %566
      %v568 = vsel %vm249, %v547, 0.0
      %569 = vadd.xlane.f32.xlu0 %v568
      %v570 = vpop.xlane.xlu0 %569
      %v571 = vsel %vm249, %v548, 0.0
      %572 = vadd.xlane.f32.xlu0 %v571
      %v573 = vpop.xlane.xlu0 %572
      %v574 = vsel %vm249, %v549, 0.0
      %575 = vadd.xlane.f32.xlu0 %v574
      %v576 = vpop.xlane.xlu0 %575
      %v577 = vsel %vm249, %v550, 0.0
      %578 = vadd.xlane.f32.xlu0 %v577
      %v579 = vpop.xlane.xlu0 %578
      %v580 = vsel %vm249, %v551, 0.0
      %581 = vadd.xlane.f32.xlu0 %v580
      %v582 = vpop.xlane.xlu0 %581
      %v583 = vsel %vm249, %v552, 0.0
      %584 = vadd.xlane.f32.xlu0 %v583
      %v585 = vpop.xlane.xlu0 %584
      %v586 = vsel %vm249, %v553, 0.0
      %587 = vadd.xlane.f32.xlu0 %v586
      %v588 = vpop.xlane.xlu0 %587
      %v589 = vsel %vm249, %v554, 0.0
      %590 = vadd.xlane.f32.xlu0 %v589
      %v591 = vpop.xlane.xlu0 %590
      %v592 = vsel %vm249, %v555, 0.0
      %593 = vadd.xlane.f32.xlu0 %v592
      %v594 = vpop.xlane.xlu0 %593
      %v595 = vsel %vm249, %v556, 0.0
      %596 = vadd.xlane.f32.xlu0 %v595
      %v597 = vpop.xlane.xlu0 %596
      %v598 = vsel %vm249, %v557, 0.0
      %599 = vadd.xlane.f32.xlu0 %v598
      %v600 = vpop.xlane.xlu0 %599
      %v601 = vsel %vm249, %v558, 0.0
      %602 = vadd.xlane.f32.xlu0 %v601
      %v603 = vpop.xlane.xlu0 %602
      %v604 = vsel %vm249, %v559, 0.0
      %605 = vadd.xlane.f32.xlu0 %v604
      %v606 = vpop.xlane.xlu0 %605
      %v607 = vsel %vm249, %v560, 0.0
      %608 = vadd.xlane.f32.xlu0 %v607
      %v609 = vpop.xlane.xlu0 %608
      %v610 = vsel %vm249, %v561, 0.0
      %611 = vadd.xlane.f32.xlu0 %v610
      %v612 = vpop.xlane.xlu0 %611
      %v613 = vsel %vm249, %v562, 0.0
      %614 = vadd.xlane.f32.xlu0 %v613
      %v615 = vpop.xlane.xlu0 %614
      %v616 = vsel %vm249, %v563, 0.0
      %617 = vadd.xlane.f32.xlu0 %v616
      %v618 = vpop.xlane.xlu0 %617
      %v619 = vsel %vm249, %v564, 0.0
      %620 = vadd.xlane.f32.xlu0 %v619
      %v621 = vpop.xlane.xlu0 %620
      %v622 = vsub.f32 %v491, %v567
      %v623 = vsub.f32 %v494, %v570
      %v624 = vsub.f32 %v497, %v573
      %v625 = vsub.f32 %v500, %v576
      %v626 = vsub.f32 %v503, %v579
      %v627 = vsub.f32 %v506, %v582
      %v628 = vsub.f32 %v509, %v585
      %v629 = vsub.f32 %v512, %v588
      %v630 = vsub.f32 %v515, %v591
      %v631 = vsub.f32 %v518, %v594
      %v632 = vsub.f32 %v521, %v597
      %v633 = vsub.f32 %v524, %v600
      %v634 = vsub.f32 %v527, %v603
      %v635 = vsub.f32 %v530, %v606
      %v636 = vsub.f32 %v533, %v609
      %v637 = vsub.f32 %v536, %v612
      %v638 = vsub.f32 %v539, %v615
      %v639 = vsub.f32 %v542, %v618
      %v640 = vsub.f32 %v545, %v621
      %v641 = vmax.f32 %v567, 1e-24
      %v642 = vmax.f32 %v570, 1e-24
      %v643 = vmax.f32 %v573, 1e-24
      %v644 = vmax.f32 %v576, 1e-24
      %v645 = vmax.f32 %v579, 1e-24
      %v646 = vmax.f32 %v582, 1e-24
      %v647 = vmax.f32 %v585, 1e-24
      %v648 = vmax.f32 %v588, 1e-24
      %v649 = vmax.f32 %v591, 1e-24
      %v650 = vmax.f32 %v594, 1e-24
      %v651 = vmax.f32 %v597, 1e-24
      %v652 = vmax.f32 %v600, 1e-24
      %v653 = vmax.f32 %v603, 1e-24
      %v654 = vmax.f32 %v606, 1e-24
      %v655 = vmax.f32 %v609, 1e-24
      %v656 = vmax.f32 %v612, 1e-24
      %v657 = vmax.f32 %v615, 1e-24
      %v658 = vmax.f32 %v618, 1e-24
      %v659 = vmax.f32 %v621, 1e-24
      %v660 = vrsqrt.pop %v641
      %v661 = vrsqrt.pop %v642
      %v662 = vrsqrt.pop %v643
      %v663 = vrsqrt.pop %v644
      %v664 = vrsqrt.pop %v645
      %v665 = vrsqrt.pop %v646
      %v666 = vrsqrt.pop %v647
      %v667 = vrsqrt.pop %v648
      %v668 = vrsqrt.pop %v649
      %v669 = vrsqrt.pop %v650
      %v670 = vrsqrt.pop %v651
      %v671 = vrsqrt.pop %v652
      %v672 = vrsqrt.pop %v653
      %v673 = vrsqrt.pop %v654
      %v674 = vrsqrt.pop %v655
      %v675 = vrsqrt.pop %v656
      %v676 = vrsqrt.pop %v657
      %v677 = vrsqrt.pop %v658
      %v678 = vrsqrt.pop %v659
      %v679 = vmax.f32 %v622, 1e-24
      %v680 = vmax.f32 %v623, 1e-24
      %v681 = vmax.f32 %v624, 1e-24
      %v682 = vmax.f32 %v625, 1e-24
      %v683 = vmax.f32 %v626, 1e-24
      %v684 = vmax.f32 %v627, 1e-24
      %v685 = vmax.f32 %v628, 1e-24
      %v686 = vmax.f32 %v629, 1e-24
      %v687 = vmax.f32 %v630, 1e-24
      %v688 = vmax.f32 %v631, 1e-24
      %v689 = vmax.f32 %v632, 1e-24
      %v690 = vmax.f32 %v633, 1e-24
      %v691 = vmax.f32 %v634, 1e-24
      %v692 = vmax.f32 %v635, 1e-24
      %v693 = vmax.f32 %v636, 1e-24
      %v694 = vmax.f32 %v637, 1e-24
      %v695 = vmax.f32 %v638, 1e-24
      %v696 = vmax.f32 %v639, 1e-24
      %v697 = vmax.f32 %v640, 1e-24
      %v698 = vrsqrt.pop %v679
      %v699 = vrsqrt.pop %v680
      %v700 = vrsqrt.pop %v681
      %v701 = vrsqrt.pop %v682
      %v702 = vrsqrt.pop %v683
      %v703 = vrsqrt.pop %v684
      %v704 = vrsqrt.pop %v685
      %v705 = vrsqrt.pop %v686
      %v706 = vrsqrt.pop %v687
      %v707 = vrsqrt.pop %v688
      %v708 = vrsqrt.pop %v689
      %v709 = vrsqrt.pop %v690
      %v710 = vrsqrt.pop %v691
      %v711 = vrsqrt.pop %v692
      %v712 = vrsqrt.pop %v693
      %v713 = vrsqrt.pop %v694
      %v714 = vrsqrt.pop %v695
      %v715 = vrsqrt.pop %v696
      %v716 = vrsqrt.pop %v697
      %v717 = vsel %vm469, %v660, %v698
      %v718 = vsel %vm469, %v661, %v699
      %v719 = vsel %vm469, %v662, %v700
      %v720 = vsel %vm469, %v663, %v701
      %v721 = vsel %vm469, %v664, %v702
      %v722 = vsel %vm469, %v665, %v703
      %v723 = vsel %vm469, %v666, %v704
      %v724 = vsel %vm469, %v667, %v705
      %v725 = vsel %vm469, %v668, %v706
      %v726 = vsel %vm469, %v669, %v707
      %v727 = vsel %vm469, %v670, %v708
      %v728 = vsel %vm469, %v671, %v709
      %v729 = vsel %vm469, %v672, %v710
      %v730 = vsel %vm469, %v673, %v711
      %v731 = vsel %vm469, %v674, %v712
      %v732 = vsel %vm469, %v675, %v713
      %v733 = vsel %vm469, %v676, %v714
      %v734 = vsel %vm469, %v677, %v715
      %v735 = vsel %vm469, %v678, %v716
      %v736 = vmul.f32 %v374, %v717
      %v737 = vmul.f32 %v379, %v718
      %v738 = vmul.f32 %v384, %v719
      %v739 = vmul.f32 %v389, %v720
      %v740 = vmul.f32 %v394, %v721
      %v741 = vmul.f32 %v399, %v722
      %v742 = vmul.f32 %v404, %v723
      %v743 = vmul.f32 %v409, %v724
      %v744 = vmul.f32 %v414, %v725
      %v745 = vmul.f32 %v419, %v726
      %v746 = vmul.f32 %v424, %v727
      %v747 = vmul.f32 %v429, %v728
      %v748 = vmul.f32 %v434, %v729
      %v749 = vmul.f32 %v439, %v730
      %v750 = vmul.f32 %v444, %v731
      %v751 = vmul.f32 %v449, %v732
      %v752 = vmul.f32 %v454, %v733
      %v753 = vmul.f32 %v459, %v734
      %v754 = vmul.f32 %v464, %v735
      %vm755 = vcmask 261120
      %756 = vst.msk [vmem:[%s207] sm:$0xff] %vm755, %v736
      %757 = vst.msk [vmem:[%s207 + $0x8] sm:$0xff] %vm755, %v737
      %758 = vst.msk [vmem:[%s207 + $0x10] sm:$0xff] %vm755, %v738
      %759 = vst.msk [vmem:[%s207 + $0x18] sm:$0xff] %vm755, %v739
      %760 = vst.msk [vmem:[%s207 + $0x20] sm:$0xff] %vm755, %v740
      %761 = vst.msk [vmem:[%s207 + $0x28] sm:$0xff] %vm755, %v741
      %762 = vst.msk [vmem:[%s207 + $0x30] sm:$0xff] %vm755, %v742
      %763 = vst.msk [vmem:[%s207 + $0x38] sm:$0xff] %vm755, %v743
      %764 = vst.msk [vmem:[%s207 + $0x40] sm:$0xff] %vm755, %v744
      %765 = vst.msk [vmem:[%s207 + $0x48] sm:$0xff] %vm755, %v745
      %766 = vst.msk [vmem:[%s207 + $0x50] sm:$0xff] %vm755, %v746
      %767 = vst.msk [vmem:[%s207 + $0x58] sm:$0xff] %vm755, %v747
      %768 = vst.msk [vmem:[%s207 + $0x60] sm:$0xff] %vm755, %v748
      %769 = vst.msk [vmem:[%s207 + $0x68] sm:$0xff] %vm755, %v749
      %770 = vst.msk [vmem:[%s207 + $0x70] sm:$0xff] %vm755, %v750
      %771 = vst.msk [vmem:[%s207 + $0x78] sm:$0xff] %vm755, %v751
      %772 = vst.msk [vmem:[%s207 + $0x80] sm:$0xff] %vm755, %v752
      %773 = vst.msk [vmem:[%s207 + $0x88] sm:$0xff] %vm755, %v753
      %774 = vst.msk [vmem:[%s207 + $0x90] sm:$0xff] %vm755, %v754
      %794 = vrot.lane.b32.xlu0 %v736, 96
      %v795 = vpop.permute.xlu0 %794
      %796 = vrot.lane.b32.xlu0 %v737, 96
      %v797 = vpop.permute.xlu0 %796
      %798 = vrot.lane.b32.xlu0 %v738, 96
      %v799 = vpop.permute.xlu0 %798
      %800 = vrot.lane.b32.xlu0 %v739, 96
      %v801 = vpop.permute.xlu0 %800
      %802 = vrot.lane.b32.xlu0 %v740, 96
      %v803 = vpop.permute.xlu0 %802
      %804 = vrot.lane.b32.xlu0 %v741, 96
      %v805 = vpop.permute.xlu0 %804
      %806 = vrot.lane.b32.xlu0 %v742, 96
      %v807 = vpop.permute.xlu0 %806
      %808 = vrot.lane.b32.xlu0 %v743, 96
      %v809 = vpop.permute.xlu0 %808
      %810 = vrot.lane.b32.xlu0 %v744, 96
      %v811 = vpop.permute.xlu0 %810
      %812 = vrot.lane.b32.xlu0 %v745, 96
      %v813 = vpop.permute.xlu0 %812
      %814 = vrot.lane.b32.xlu0 %v746, 96
      %v815 = vpop.permute.xlu0 %814
      %816 = vrot.lane.b32.xlu0 %v747, 96
      %v817 = vpop.permute.xlu0 %816
      %818 = vrot.lane.b32.xlu0 %v748, 96
      %v819 = vpop.permute.xlu0 %818
      %820 = vrot.lane.b32.xlu0 %v749, 96
      %v821 = vpop.permute.xlu0 %820
      %822 = vrot.lane.b32.xlu0 %v750, 96
      %v823 = vpop.permute.xlu0 %822
      %824 = vrot.lane.b32.xlu0 %v751, 96
      %v825 = vpop.permute.xlu0 %824
      %826 = vrot.lane.b32.xlu0 %v752, 96
      %v827 = vpop.permute.xlu0 %826
      %828 = vrot.lane.b32.xlu0 %v753, 96
      %v829 = vpop.permute.xlu0 %828
      %830 = vrot.lane.b32.xlu0 %v754, 96
      %v831 = vpop.permute.xlu0 %830
      %851 = vst.msk [vmem:[%s213] sm:$0xff] %vm755, %v795
      %852 = vst.msk [vmem:[%s213 + $0x8] sm:$0xff] %vm755, %v797
      %853 = vst.msk [vmem:[%s213 + $0x10] sm:$0xff] %vm755, %v799
      %854 = vst.msk [vmem:[%s213 + $0x18] sm:$0xff] %vm755, %v801
      %855 = vst.msk [vmem:[%s213 + $0x20] sm:$0xff] %vm755, %v803
      %856 = vst.msk [vmem:[%s213 + $0x28] sm:$0xff] %vm755, %v805
      %857 = vst.msk [vmem:[%s213 + $0x30] sm:$0xff] %vm755, %v807
      %858 = vst.msk [vmem:[%s213 + $0x38] sm:$0xff] %vm755, %v809
      %859 = vst.msk [vmem:[%s213 + $0x40] sm:$0xff] %vm755, %v811
      %860 = vst.msk [vmem:[%s213 + $0x48] sm:$0xff] %vm755, %v813
      %861 = vst.msk [vmem:[%s213 + $0x50] sm:$0xff] %vm755, %v815
      %862 = vst.msk [vmem:[%s213 + $0x58] sm:$0xff] %vm755, %v817
      %863 = vst.msk [vmem:[%s213 + $0x60] sm:$0xff] %vm755, %v819
      %864 = vst.msk [vmem:[%s213 + $0x68] sm:$0xff] %vm755, %v821
      %865 = vst.msk [vmem:[%s213 + $0x70] sm:$0xff] %vm755, %v823
      %866 = vst.msk [vmem:[%s213 + $0x78] sm:$0xff] %vm755, %v825
      %867 = vst.msk [vmem:[%s213 + $0x80] sm:$0xff] %vm755, %v827
      %868 = vst.msk [vmem:[%s213 + $0x88] sm:$0xff] %vm755, %v829
      %869 = vst.msk [vmem:[%s213 + $0x90] sm:$0xff] %vm755, %v831
      %s870 = smul.u32 19, %s16
      %p871 = scmp.lt.s32.totalorder %s870, 37
      %s872 = scalar_select %p871, %s870, 37
      %s873 = smul.addr %s872, 8
      %s874 = scalar_lea.vmem %s3, %s873
      %s875 = smul.u32 19, %s16
      %p876 = scmp.lt.s32.totalorder %s875, 37
      %s877 = scalar_select %p876, %s875, 37
      %s878 = smul.addr %s877, 8
      %s879 = scalar_lea.vmem %s4, %s878
      // Predicated region
      $region33: #{tpu_custom_call.1} parent=31 // pred_check
        %p880 = pneg %p102
      $region34: #{tpu_custom_call.1} parent=31 // pred_check_branch
        %882 = sbr.rel (%p880) target = $region36
      $region35: #{tpu_custom_call.1} parent=31 // pred_region
        %s883 = smul.u32 19, %s16
      $region36: #{tpu_custom_call.1} parent=31 // pred_fallthru
        _
      // Predicated region
      $region37: #{tpu_custom_call.1} parent=31 // pred_check
        %p884 = pneg %p128
      $region38: #{tpu_custom_call.1} parent=31 // pred_check_branch
        %886 = sbr.rel (%p884) target = $region40
      $region39: #{tpu_custom_call.1} parent=31 // pred_region
        %s887 = smul.u32 19, %s16
      $region40: #{tpu_custom_call.1} parent=31 // pred_fallthru
        _
    $region32: #{tpu_custom_call.1} parent=5 // pred_fallthru
      _
    %p888 = scmp.le.s32.totalorder 2, %s11
    // Predicated region
    $region41: #{tpu_custom_call.1} parent=5 // pred_check
      %p889 = pneg %p888
    $region42: #{tpu_custom_call.1} parent=5 // pred_check_branch
      %891 = sbr.rel (%p889) target = $region44
    $region43: #{tpu_custom_call.1} parent=5 // pred_region
      %s892 = ssub.s32 %s11, 2
      // Predicated region
      $region45: #{tpu_custom_call.1} parent=43 // pred_check
        %p893 = pneg %p108
      $region46: #{tpu_custom_call.1} parent=43 // pred_check_branch
        %895 = sbr.rel (%p893) target = $region48
      $region47: #{tpu_custom_call.1} parent=43 // pred_region
        %s896 = smul.u32 19, %s17
        %p897 = scmp.lt.s32.totalorder %s896, 37
        %s898 = scalar_select %p897, %s896, 37
        %s899 = smul.addr %s898, 8
        %s900 = scalar_lea.vmem %s3, %s899
      $region48: #{tpu_custom_call.1} parent=43 // pred_fallthru
        _
      // Predicated region
      $region49: #{tpu_custom_call.1} parent=43 // pred_check
        %p901 = pneg %p134
      $region50: #{tpu_custom_call.1} parent=43 // pred_check_branch
        %903 = sbr.rel (%p901) target = $region52
      $region51: #{tpu_custom_call.1} parent=43 // pred_region
        %s904 = smul.u32 19, %s17
        %p905 = scmp.lt.s32.totalorder %s904, 37
        %s906 = scalar_select %p905, %s904, 37
        %s907 = smul.addr %s906, 8
        %s908 = scalar_lea.vmem %s4, %s907
      $region52: #{tpu_custom_call.1} parent=43 // pred_fallthru
        _
    $region44: #{tpu_custom_call.1} parent=5 // pred_fallthru
      _
  $region6: #{tpu_custom_call.1} parent=0 // loop_footer
    %s15 = sadd.s32 1, %s11
  $region7: #{tpu_custom_call.1} parent=0 // loop_footer_branch
    %10 = sbr.rel target = $region3
  $region8: #{tpu_custom_call.1} parent=0 // loop_exit
    _

</llo_original>
